<compile_context>
chip_gen: v6e
topology: v6e:2x2x1
jax: 0.10.0
libtpu: 0.0.40
codegen_flags: <defaults>
</compile_context>

<pallas_src>
import numpy as np

import jax
import jax.numpy as jnp
from jax.experimental import pallas as pl
from jax.experimental.pallas import tpu as pltpu

DROPOUT_RATE = 0.5
KEEP_PROB = 1.0 - DROPOUT_RATE
# keep an element iff its raw uint32 bits < KEEP_THRESHOLD  (P[keep] = KEEP_PROB)
KEEP_THRESHOLD = np.uint32(min(int(round(KEEP_PROB * 2.0**32)), 2**32 - 1))
INV_KEEP = np.float32(1.0 / KEEP_PROB)


def dropout_mlp_kernel(x_ref,
                       w1_ref, b1_ref, w2_ref, b2_ref, w3_ref, b3_ref,
                       w4_ref, b4_ref, w5_ref, b5_ref, w6_ref, b6_ref,
                       m1_ref, m2_ref, m3_ref, m4_ref, m5_ref,
                       o_ref):
    h = x_ref[...].astype(jnp.float32)

    def layer(h, w_ref, b_ref, m_ref):
        y = jnp.dot(h, w_ref[...], preferred_element_type=jnp.float32)
        y = y + b_ref[...]              # (1, out) bias broadcasts over rows
        y = jnp.maximum(y, 0.0)         # ReLU
        keep = m_ref[...] < KEEP_THRESHOLD
        return jnp.where(keep, y, 0.0) * INV_KEEP   # inverted dropout

    h = layer(h, w1_ref, b1_ref, m1_ref)
    h = layer(h, w2_ref, b2_ref, m2_ref)
    h = layer(h, w3_ref, b3_ref, m3_ref)
    h = layer(h, w4_ref, b4_ref, m4_ref)
    h = layer(h, w5_ref, b5_ref, m5_ref)

    # final linear layer: no ReLU, no dropout
    out = jnp.dot(h, w6_ref[...], preferred_element_type=jnp.float32) + b6_ref[...]
    o_ref[...] = out.astype(o_ref.dtype)


def dropout_mlp(x, params, dropout_bits, *, block_batch=None):
    """Fused DropoutMLP forward.

    x:            (batch, in_size) f32
    params:       list of 6 (W, b) pairs, W=(in, out) f32, b=(1, out) f32
    dropout_bits: list of 5 uint32 arrays, each (batch, hidden) — raw random
                  bits used for the per-layer dropout masks.
    """
    batch, in_size = x.shape
    hidden = params[1][0].shape[0]
    out_size = params[-1][0].shape[1]

    if block_batch is None:
        # Amortize per-step overhead; for large MC-dropout batches prefer >= 512.
        block_batch = min(batch, 512)
    # (8,128) rule on the sublane dim: block rows must be a multiple of 8 or the
    # whole batch, and must evenly tile the batch.
    assert batch % block_batch == 0, "batch must be divisible by block_batch"
    assert block_batch == batch or block_batch % 8 == 0, \
        "block_batch must be a multiple of 8 (or equal to batch)"

    flat_wb = []
    for w, b in params:
        flat_wb.extend([w, b])

    grid = (batch // block_batch,)

    # x and dropout bits tile over batch; weights/biases stay VMEM-resident.
    x_spec = pl.BlockSpec((block_batch, in_size), lambda i: (i, 0))
    wb_specs = []
    for w, b in params:
        wb_specs.append(pl.BlockSpec(w.shape, lambda i: (0, 0)))
        wb_specs.append(pl.BlockSpec(b.shape, lambda i: (0, 0)))
    mask_specs = [pl.BlockSpec((block_batch, hidden), lambda i: (i, 0))
                  for _ in dropout_bits]
    out_spec = pl.BlockSpec((block_batch, out_size), lambda i: (i, 0))

    # Advisory cost estimate for XLA scheduling.
    matmul_dims = [(in_size, hidden)] + [(hidden, hidden)] * 4 + [(hidden, out_size)]
    flops = 2 * batch * sum(a * b for a, b in matmul_dims)
    bytes_accessed = 4 * (x.size
                          + sum(w.size + b.size for w, b in params)
                          + sum(m.size for m in dropout_bits)
                          + batch * out_size)
    cost = pl.CostEstimate(flops=flops, transcendentals=0,
                           bytes_accessed=bytes_accessed)

    return pl.pallas_call(
        dropout_mlp_kernel,
        out_shape=jax.ShapeDtypeStruct((batch, out_size), jnp.float32),
        grid=grid,
        in_specs=[x_spec] + wb_specs + mask_specs,
        out_specs=out_spec,
        compiler_params=pltpu.CompilerParams(
            dimension_semantics=("parallel",),        # megacore-shard batch on v7x
            vmem_limit_bytes=32 * 1024 * 1024,
        ),
        cost_estimate=cost,
    )(x, *flat_wb, *dropout_bits)


def init_params(key, in_size, hidden_size, out_size):
    """Deterministic init mimicking PyTorch nn.Linear default (U(+/- 1/sqrt(fan_in)))."""
    sizes = [(in_size, hidden_size),
             (hidden_size, hidden_size),
             (hidden_size, hidden_size),
             (hidden_size, hidden_size),
             (hidden_size, hidden_size),
             (hidden_size, out_size)]
    params = []
    for fan_in, fan_out in sizes:
        key, kw, kb = jax.random.split(key, 3)
        bound = 1.0 / (fan_in ** 0.5)
        w = jax.random.uniform(kw, (fan_in, fan_out), jnp.float32, -bound, bound)
        b = jax.random.uniform(kb, (1, fan_out), jnp.float32, -bound, bound)
        params.append((w, b))
    return params


def reference_forward(x, params, dropout_bits):
    """Pure-JAX reference with the same masks (for correctness checking)."""
    h = x
    for li, (w, b) in enumerate(params[:-1]):
        h = jnp.maximum(h @ w + b, 0.0)
        keep = dropout_bits[li] < KEEP_THRESHOLD
        h = jnp.where(keep, h, 0.0) * INV_KEEP
    w, b = params[-1]
    return h @ w + b


if __name__ == "__main__":
    key = jax.random.PRNGKey(0)
    kx, kp, kd = jax.random.split(key, 3)

    batch, in_size, hidden_size, out_size = 16, 16, 32, 8
    x = jax.random.normal(kx, (batch, in_size), jnp.float32)
    params = init_params(kp, in_size, hidden_size, out_size)

    # One independent uint32 bit tensor per dropout layer (training-mode masks).
    mask_keys = jax.random.split(kd, 5)
    dropout_bits = [jax.random.bits(k, (batch, hidden_size), dtype=jnp.uint32)
                    for k in mask_keys]

    out = dropout_mlp(x, params, dropout_bits, block_batch=8)
    jax.block_until_ready(out)

    assert out.shape == (batch, out_size)
    ref = reference_forward(x, params, dropout_bits)
    assert bool(jnp.all(jnp.isfinite(out)))
    assert bool(jnp.allclose(out, ref, rtol=1e-2, atol=1e-2)), "kernel != reference"
    print("KERNEL_OK")
</pallas_src>

<mosaic_0001>
module attributes {stable_mosaic.version = 11 : i64} {
  func.func @dropout_mlp_kernel(%arg0: i32, %arg1: memref<8x16xf32, #tpu.memory_space<vmem>>, %arg2: memref<16x32xf32, #tpu.memory_space<vmem>>, %arg3: memref<1x32xf32, #tpu.memory_space<vmem>>, %arg4: memref<32x32xf32, #tpu.memory_space<vmem>>, %arg5: memref<1x32xf32, #tpu.memory_space<vmem>>, %arg6: memref<32x32xf32, #tpu.memory_space<vmem>>, %arg7: memref<1x32xf32, #tpu.memory_space<vmem>>, %arg8: memref<32x32xf32, #tpu.memory_space<vmem>>, %arg9: memref<1x32xf32, #tpu.memory_space<vmem>>, %arg10: memref<32x32xf32, #tpu.memory_space<vmem>>, %arg11: memref<1x32xf32, #tpu.memory_space<vmem>>, %arg12: memref<32x8xf32, #tpu.memory_space<vmem>>, %arg13: memref<1x8xf32, #tpu.memory_space<vmem>>, %arg14: memref<8x32xi32, #tpu.memory_space<vmem>>, %arg15: memref<8x32xi32, #tpu.memory_space<vmem>>, %arg16: memref<8x32xi32, #tpu.memory_space<vmem>>, %arg17: memref<8x32xi32, #tpu.memory_space<vmem>>, %arg18: memref<8x32xi32, #tpu.memory_space<vmem>>, %arg19: memref<8x8xf32, #tpu.memory_space<vmem>>) attributes {dimension_semantics = [#tpu.dimension_semantics<parallel>], iteration_bounds = array<i64: 2>, scalar_prefetch = 0 : i64, scratch_operands = 0 : i64, tpu.core_type = #tpu.core_type<tc>, window_params = [{transform_indices = @transform_0, window_bounds = array<i64: 8, 16>}, {pipeline_mode = #tpu.pipeline_mode<synchronous>, transform_indices = @transform_1, window_bounds = array<i64: 16, 32>}, {pipeline_mode = #tpu.pipeline_mode<synchronous>, transform_indices = @transform_2, window_bounds = array<i64: 1, 32>}, {pipeline_mode = #tpu.pipeline_mode<synchronous>, transform_indices = @transform_3, window_bounds = array<i64: 32, 32>}, {pipeline_mode = #tpu.pipeline_mode<synchronous>, transform_indices = @transform_4, window_bounds = array<i64: 1, 32>}, {pipeline_mode = #tpu.pipeline_mode<synchronous>, transform_indices = @transform_5, window_bounds = array<i64: 32, 32>}, {pipeline_mode = #tpu.pipeline_mode<synchronous>, transform_indices = @transform_6, window_bounds = array<i64: 1, 32>}, {pipeline_mode = #tpu.pipeline_mode<synchronous>, transform_indices = @transform_7, window_bounds = array<i64: 32, 32>}, {pipeline_mode = #tpu.pipeline_mode<synchronous>, transform_indices = @transform_8, window_bounds = array<i64: 1, 32>}, {pipeline_mode = #tpu.pipeline_mode<synchronous>, transform_indices = @transform_9, window_bounds = array<i64: 32, 32>}, {pipeline_mode = #tpu.pipeline_mode<synchronous>, transform_indices = @transform_10, window_bounds = array<i64: 1, 32>}, {pipeline_mode = #tpu.pipeline_mode<synchronous>, transform_indices = @transform_11, window_bounds = array<i64: 32, 8>}, {pipeline_mode = #tpu.pipeline_mode<synchronous>, transform_indices = @transform_12, window_bounds = array<i64: 1, 8>}, {transform_indices = @transform_13, window_bounds = array<i64: 8, 32>}, {transform_indices = @transform_14, window_bounds = array<i64: 8, 32>}, {transform_indices = @transform_15, window_bounds = array<i64: 8, 32>}, {transform_indices = @transform_16, window_bounds = array<i64: 8, 32>}, {transform_indices = @transform_17, window_bounds = array<i64: 8, 32>}, {transform_indices = @transform_18, window_bounds = array<i64: 8, 8>}]} {
    %c0 = arith.constant 0 : index
    %c0_0 = arith.constant 0 : index
    %0 = vector.load %arg1[%c0, %c0_0] : memref<8x16xf32, #tpu.memory_space<vmem>>, vector<8x16xf32>
    %c0_1 = arith.constant 0 : index
    %c0_2 = arith.constant 0 : index
    %1 = vector.load %arg2[%c0_1, %c0_2] : memref<16x32xf32, #tpu.memory_space<vmem>>, vector<16x32xf32>
    %cst = arith.constant dense<0.000000e+00> : vector<8x32xf32>
    %2 = tpu.matmul %0, %1, %cst {dimension_numbers = #tpu.dot_dimension_numbers<[1], [0], [0], [1], [0, 0, 1, 1], [], []>} : vector<8x16xf32>, vector<16x32xf32>, vector<8x32xf32> -> vector<8x32xf32>
    %c0_3 = arith.constant 0 : index
    %c0_4 = arith.constant 0 : index
    %3 = vector.load %arg3[%c0_3, %c0_4] : memref<1x32xf32, #tpu.memory_space<vmem>>, vector<1x32xf32>
    %4 = vector.broadcast %3 : vector<1x32xf32> to vector<8x32xf32>
    %5 = arith.addf %2, %4 : vector<8x32xf32>
    %cst_5 = arith.constant 0.000000e+00 : f32
    %6 = vector.broadcast %cst_5 : f32 to vector<8x32xf32>
    %7 = arith.maximumf %5, %6 : vector<8x32xf32>
    %c0_6 = arith.constant 0 : index
    %c0_7 = arith.constant 0 : index
    %8 = vector.load %arg14[%c0_6, %c0_7] : memref<8x32xi32, #tpu.memory_space<vmem>>, vector<8x32xi32>
    %c-2147483648_i32 = arith.constant -2147483648 : i32
    %9 = vector.broadcast %c-2147483648_i32 : i32 to vector<8x32xi32>
    %10 = arith.cmpi ult, %8, %9 : vector<8x32xi32>
    %cst_8 = arith.constant 0.000000e+00 : f32
    %11 = vector.broadcast %cst_8 : f32 to vector<8x32xf32>
    %12 = arith.select %10, %7, %11 : vector<8x32xi1>, vector<8x32xf32>
    %cst_9 = arith.constant 2.000000e+00 : f32
    %13 = vector.broadcast %cst_9 : f32 to vector<8x32xf32>
    %14 = arith.mulf %12, %13 : vector<8x32xf32>
    %c0_10 = arith.constant 0 : index
    %c0_11 = arith.constant 0 : index
    %15 = vector.load %arg4[%c0_10, %c0_11] : memref<32x32xf32, #tpu.memory_space<vmem>>, vector<32x32xf32>
    %cst_12 = arith.constant dense<0.000000e+00> : vector<8x32xf32>
    %16 = tpu.matmul %14, %15, %cst_12 {dimension_numbers = #tpu.dot_dimension_numbers<[1], [0], [0], [1], [0, 0, 1, 1], [], []>} : vector<8x32xf32>, vector<32x32xf32>, vector<8x32xf32> -> vector<8x32xf32>
    %c0_13 = arith.constant 0 : index
    %c0_14 = arith.constant 0 : index
    %17 = vector.load %arg5[%c0_13, %c0_14] : memref<1x32xf32, #tpu.memory_space<vmem>>, vector<1x32xf32>
    %18 = vector.broadcast %17 : vector<1x32xf32> to vector<8x32xf32>
    %19 = arith.addf %16, %18 : vector<8x32xf32>
    %cst_15 = arith.constant 0.000000e+00 : f32
    %20 = vector.broadcast %cst_15 : f32 to vector<8x32xf32>
    %21 = arith.maximumf %19, %20 : vector<8x32xf32>
    %c0_16 = arith.constant 0 : index
    %c0_17 = arith.constant 0 : index
    %22 = vector.load %arg15[%c0_16, %c0_17] : memref<8x32xi32, #tpu.memory_space<vmem>>, vector<8x32xi32>
    %c-2147483648_i32_18 = arith.constant -2147483648 : i32
    %23 = vector.broadcast %c-2147483648_i32_18 : i32 to vector<8x32xi32>
    %24 = arith.cmpi ult, %22, %23 : vector<8x32xi32>
    %cst_19 = arith.constant 0.000000e+00 : f32
    %25 = vector.broadcast %cst_19 : f32 to vector<8x32xf32>
    %26 = arith.select %24, %21, %25 : vector<8x32xi1>, vector<8x32xf32>
    %cst_20 = arith.constant 2.000000e+00 : f32
    %27 = vector.broadcast %cst_20 : f32 to vector<8x32xf32>
    %28 = arith.mulf %26, %27 : vector<8x32xf32>
    %c0_21 = arith.constant 0 : index
    %c0_22 = arith.constant 0 : index
    %29 = vector.load %arg6[%c0_21, %c0_22] : memref<32x32xf32, #tpu.memory_space<vmem>>, vector<32x32xf32>
    %cst_23 = arith.constant dense<0.000000e+00> : vector<8x32xf32>
    %30 = tpu.matmul %28, %29, %cst_23 {dimension_numbers = #tpu.dot_dimension_numbers<[1], [0], [0], [1], [0, 0, 1, 1], [], []>} : vector<8x32xf32>, vector<32x32xf32>, vector<8x32xf32> -> vector<8x32xf32>
    %c0_24 = arith.constant 0 : index
    %c0_25 = arith.constant 0 : index
    %31 = vector.load %arg7[%c0_24, %c0_25] : memref<1x32xf32, #tpu.memory_space<vmem>>, vector<1x32xf32>
    %32 = vector.broadcast %31 : vector<1x32xf32> to vector<8x32xf32>
    %33 = arith.addf %30, %32 : vector<8x32xf32>
    %cst_26 = arith.constant 0.000000e+00 : f32
    %34 = vector.broadcast %cst_26 : f32 to vector<8x32xf32>
    %35 = arith.maximumf %33, %34 : vector<8x32xf32>
    %c0_27 = arith.constant 0 : index
    %c0_28 = arith.constant 0 : index
    %36 = vector.load %arg16[%c0_27, %c0_28] : memref<8x32xi32, #tpu.memory_space<vmem>>, vector<8x32xi32>
    %c-2147483648_i32_29 = arith.constant -2147483648 : i32
    %37 = vector.broadcast %c-2147483648_i32_29 : i32 to vector<8x32xi32>
    %38 = arith.cmpi ult, %36, %37 : vector<8x32xi32>
    %cst_30 = arith.constant 0.000000e+00 : f32
    %39 = vector.broadcast %cst_30 : f32 to vector<8x32xf32>
    %40 = arith.select %38, %35, %39 : vector<8x32xi1>, vector<8x32xf32>
    %cst_31 = arith.constant 2.000000e+00 : f32
    %41 = vector.broadcast %cst_31 : f32 to vector<8x32xf32>
    %42 = arith.mulf %40, %41 : vector<8x32xf32>
    %c0_32 = arith.constant 0 : index
    %c0_33 = arith.constant 0 : index
    %43 = vector.load %arg8[%c0_32, %c0_33] : memref<32x32xf32, #tpu.memory_space<vmem>>, vector<32x32xf32>
    %cst_34 = arith.constant dense<0.000000e+00> : vector<8x32xf32>
    %44 = tpu.matmul %42, %43, %cst_34 {dimension_numbers = #tpu.dot_dimension_numbers<[1], [0], [0], [1], [0, 0, 1, 1], [], []>} : vector<8x32xf32>, vector<32x32xf32>, vector<8x32xf32> -> vector<8x32xf32>
    %c0_35 = arith.constant 0 : index
    %c0_36 = arith.constant 0 : index
    %45 = vector.load %arg9[%c0_35, %c0_36] : memref<1x32xf32, #tpu.memory_space<vmem>>, vector<1x32xf32>
    %46 = vector.broadcast %45 : vector<1x32xf32> to vector<8x32xf32>
    %47 = arith.addf %44, %46 : vector<8x32xf32>
    %cst_37 = arith.constant 0.000000e+00 : f32
    %48 = vector.broadcast %cst_37 : f32 to vector<8x32xf32>
    %49 = arith.maximumf %47, %48 : vector<8x32xf32>
    %c0_38 = arith.constant 0 : index
    %c0_39 = arith.constant 0 : index
    %50 = vector.load %arg17[%c0_38, %c0_39] : memref<8x32xi32, #tpu.memory_space<vmem>>, vector<8x32xi32>
    %c-2147483648_i32_40 = arith.constant -2147483648 : i32
    %51 = vector.broadcast %c-2147483648_i32_40 : i32 to vector<8x32xi32>
    %52 = arith.cmpi ult, %50, %51 : vector<8x32xi32>
    %cst_41 = arith.constant 0.000000e+00 : f32
    %53 = vector.broadcast %cst_41 : f32 to vector<8x32xf32>
    %54 = arith.select %52, %49, %53 : vector<8x32xi1>, vector<8x32xf32>
    %cst_42 = arith.constant 2.000000e+00 : f32
    %55 = vector.broadcast %cst_42 : f32 to vector<8x32xf32>
    %56 = arith.mulf %54, %55 : vector<8x32xf32>
    %c0_43 = arith.constant 0 : index
    %c0_44 = arith.constant 0 : index
    %57 = vector.load %arg10[%c0_43, %c0_44] : memref<32x32xf32, #tpu.memory_space<vmem>>, vector<32x32xf32>
    %cst_45 = arith.constant dense<0.000000e+00> : vector<8x32xf32>
    %58 = tpu.matmul %56, %57, %cst_45 {dimension_numbers = #tpu.dot_dimension_numbers<[1], [0], [0], [1], [0, 0, 1, 1], [], []>} : vector<8x32xf32>, vector<32x32xf32>, vector<8x32xf32> -> vector<8x32xf32>
    %c0_46 = arith.constant 0 : index
    %c0_47 = arith.constant 0 : index
    %59 = vector.load %arg11[%c0_46, %c0_47] : memref<1x32xf32, #tpu.memory_space<vmem>>, vector<1x32xf32>
    %60 = vector.broadcast %59 : vector<1x32xf32> to vector<8x32xf32>
    %61 = arith.addf %58, %60 : vector<8x32xf32>
    %cst_48 = arith.constant 0.000000e+00 : f32
    %62 = vector.broadcast %cst_48 : f32 to vector<8x32xf32>
    %63 = arith.maximumf %61, %62 : vector<8x32xf32>
    %c0_49 = arith.constant 0 : index
    %c0_50 = arith.constant 0 : index
    %64 = vector.load %arg18[%c0_49, %c0_50] : memref<8x32xi32, #tpu.memory_space<vmem>>, vector<8x32xi32>
    %c-2147483648_i32_51 = arith.constant -2147483648 : i32
    %65 = vector.broadcast %c-2147483648_i32_51 : i32 to vector<8x32xi32>
    %66 = arith.cmpi ult, %64, %65 : vector<8x32xi32>
    %cst_52 = arith.constant 0.000000e+00 : f32
    %67 = vector.broadcast %cst_52 : f32 to vector<8x32xf32>
    %68 = arith.select %66, %63, %67 : vector<8x32xi1>, vector<8x32xf32>
    %cst_53 = arith.constant 2.000000e+00 : f32
    %69 = vector.broadcast %cst_53 : f32 to vector<8x32xf32>
    %70 = arith.mulf %68, %69 : vector<8x32xf32>
    %c0_54 = arith.constant 0 : index
    %c0_55 = arith.constant 0 : index
    %71 = vector.load %arg12[%c0_54, %c0_55] : memref<32x8xf32, #tpu.memory_space<vmem>>, vector<32x8xf32>
    %cst_56 = arith.constant dense<0.000000e+00> : vector<8x8xf32>
    %72 = tpu.matmul %70, %71, %cst_56 {dimension_numbers = #tpu.dot_dimension_numbers<[1], [0], [0], [1], [0, 0, 1, 1], [], []>} : vector<8x32xf32>, vector<32x8xf32>, vector<8x8xf32> -> vector<8x8xf32>
    %c0_57 = arith.constant 0 : index
    %c0_58 = arith.constant 0 : index
    %73 = vector.load %arg13[%c0_57, %c0_58] : memref<1x8xf32, #tpu.memory_space<vmem>>, vector<1x8xf32>
    %74 = vector.broadcast %73 : vector<1x8xf32> to vector<8x8xf32>
    %75 = arith.addf %72, %74 : vector<8x8xf32>
    %c0_59 = arith.constant 0 : index
    %c0_60 = arith.constant 0 : index
    %76 = vector.load %arg19[%c0_59, %c0_60] : memref<8x8xf32, #tpu.memory_space<vmem>>, vector<8x8xf32>
    tpu.vector_store %arg19[%c0_59, %c0_60], %75 {strides = array<i32>} : memref<8x8xf32, #tpu.memory_space<vmem>>, vector<8x8xf32>,
    return
  }
  func.func @transform_0(%arg0: i32) -> (i32, i32) {
    %c0_i32 = arith.constant 0 : i32
    %c0_i32_0 = arith.constant 0 : i32
    return %arg0, %c0_i32 : i32, i32
  }
  func.func @transform_1(%arg0: i32) -> (i32, i32) {
    %c0_i32 = arith.constant 0 : i32
    %c0_i32_0 = arith.constant 0 : i32
    %c0_i32_1 = arith.constant 0 : i32
    return %c0_i32, %c0_i32_0 : i32, i32
  }
  func.func @transform_2(%arg0: i32) -> (i32, i32) {
    %c0_i32 = arith.constant 0 : i32
    %c0_i32_0 = arith.constant 0 : i32
    %c0_i32_1 = arith.constant 0 : i32
    return %c0_i32, %c0_i32_0 : i32, i32
  }
  func.func @transform_3(%arg0: i32) -> (i32, i32) {
    %c0_i32 = arith.constant 0 : i32
    %c0_i32_0 = arith.constant 0 : i32
    %c0_i32_1 = arith.constant 0 : i32
    return %c0_i32, %c0_i32_0 : i32, i32
  }
  func.func @transform_4(%arg0: i32) -> (i32, i32) {
    %c0_i32 = arith.constant 0 : i32
    %c0_i32_0 = arith.constant 0 : i32
    %c0_i32_1 = arith.constant 0 : i32
    return %c0_i32, %c0_i32_0 : i32, i32
  }
  func.func @transform_5(%arg0: i32) -> (i32, i32) {
    %c0_i32 = arith.constant 0 : i32
    %c0_i32_0 = arith.constant 0 : i32
    %c0_i32_1 = arith.constant 0 : i32
    return %c0_i32, %c0_i32_0 : i32, i32
  }
  func.func @transform_6(%arg0: i32) -> (i32, i32) {
    %c0_i32 = arith.constant 0 : i32
    %c0_i32_0 = arith.constant 0 : i32
    %c0_i32_1 = arith.constant 0 : i32
    return %c0_i32, %c0_i32_0 : i32, i32
  }
  func.func @transform_7(%arg0: i32) -> (i32, i32) {
    %c0_i32 = arith.constant 0 : i32
    %c0_i32_0 = arith.constant 0 : i32
    %c0_i32_1 = arith.constant 0 : i32
    return %c0_i32, %c0_i32_0 : i32, i32
  }
  func.func @transform_8(%arg0: i32) -> (i32, i32) {
    %c0_i32 = arith.constant 0 : i32
    %c0_i32_0 = arith.constant 0 : i32
    %c0_i32_1 = arith.constant 0 : i32
    return %c0_i32, %c0_i32_0 : i32, i32
  }
  func.func @transform_9(%arg0: i32) -> (i32, i32) {
    %c0_i32 = arith.constant 0 : i32
    %c0_i32_0 = arith.constant 0 : i32
    %c0_i32_1 = arith.constant 0 : i32
    return %c0_i32, %c0_i32_0 : i32, i32
  }
  func.func @transform_10(%arg0: i32) -> (i32, i32) {
    %c0_i32 = arith.constant 0 : i32
    %c0_i32_0 = arith.constant 0 : i32
    %c0_i32_1 = arith.constant 0 : i32
    return %c0_i32, %c0_i32_0 : i32, i32
  }
  func.func @transform_11(%arg0: i32) -> (i32, i32) {
    %c0_i32 = arith.constant 0 : i32
    %c0_i32_0 = arith.constant 0 : i32
    %c0_i32_1 = arith.constant 0 : i32
    return %c0_i32, %c0_i32_0 : i32, i32
  }
  func.func @transform_12(%arg0: i32) -> (i32, i32) {
    %c0_i32 = arith.constant 0 : i32
    %c0_i32_0 = arith.constant 0 : i32
    %c0_i32_1 = arith.constant 0 : i32
    return %c0_i32, %c0_i32_0 : i32, i32
  }
  func.func @transform_13(%arg0: i32) -> (i32, i32) {
    %c0_i32 = arith.constant 0 : i32
    %c0_i32_0 = arith.constant 0 : i32
    return %arg0, %c0_i32 : i32, i32
  }
  func.func @transform_14(%arg0: i32) -> (i32, i32) {
    %c0_i32 = arith.constant 0 : i32
    %c0_i32_0 = arith.constant 0 : i32
    return %arg0, %c0_i32 : i32, i32
  }
  func.func @transform_15(%arg0: i32) -> (i32, i32) {
    %c0_i32 = arith.constant 0 : i32
    %c0_i32_0 = arith.constant 0 : i32
    return %arg0, %c0_i32 : i32, i32
  }
  func.func @transform_16(%arg0: i32) -> (i32, i32) {
    %c0_i32 = arith.constant 0 : i32
    %c0_i32_0 = arith.constant 0 : i32
    return %arg0, %c0_i32 : i32, i32
  }
  func.func @transform_17(%arg0: i32) -> (i32, i32) {
    %c0_i32 = arith.constant 0 : i32
    %c0_i32_0 = arith.constant 0 : i32
    return %arg0, %c0_i32 : i32, i32
  }
  func.func @transform_18(%arg0: i32) -> (i32, i32) {
    %c0_i32 = arith.constant 0 : i32
    %c0_i32_0 = arith.constant 0 : i32
    return %arg0, %c0_i32 : i32, i32
  }
}

</mosaic_0001>

<llo_original>
// kernel: tpu_custom_call.1
$region0: #{tpu_custom_call.1}
  #allocation0 [shape = 'u32[]', space=smem, size = 0x4, offset = 0x4, fixed_abs, tag = 'smem constant byte address 0x4 - core index']
  #allocation1 [shape = 'u32[144,128]{1,0:T(1,128)}', space=vmem, size = 0x12000, scoped, tag = 'internal scratch']
  %s0 = inlined_call_operand.hbm [shape: f32[16,16], index: 0, kind: input, shape index: {}]
  %s1 = inlined_call_operand.hbm [shape: f32[16,32], index: 1, kind: input, shape index: {}]
  %s2 = inlined_call_operand.vmem [shape: f32[1,32], index: 2, kind: input, shape index: {}]
  %s3 = inlined_call_operand.vmem [shape: f32[32,32], index: 3, kind: input, shape index: {}]
  %s4 = inlined_call_operand.hbm [shape: f32[1,32], index: 4, kind: input, shape index: {}]
  %s5 = inlined_call_operand.hbm [shape: f32[32,32], index: 5, kind: input, shape index: {}]
  %s6 = inlined_call_operand.hbm [shape: f32[1,32], index: 6, kind: input, shape index: {}]
  %s7 = inlined_call_operand.hbm [shape: f32[32,32], index: 7, kind: input, shape index: {}]
  %s8 = inlined_call_operand.hbm [shape: f32[1,32], index: 8, kind: input, shape index: {}]
  %s9 = inlined_call_operand.hbm [shape: f32[32,32], index: 9, kind: input, shape index: {}]
  %s10 = inlined_call_operand.hbm [shape: f32[1,32], index: 10, kind: input, shape index: {}]
  %s11 = inlined_call_operand.vmem [shape: f32[32,8], index: 11, kind: input, shape index: {}]
  %s12 = inlined_call_operand.hbm [shape: f32[1,8], index: 12, kind: input, shape index: {}]
  %s13 = inlined_call_operand.vmem [shape: u32[16,32], index: 13, kind: input, shape index: {}]
  %s14 = inlined_call_operand.vmem [shape: u32[16,32], index: 14, kind: input, shape index: {}]
  %s15 = inlined_call_operand.hbm [shape: u32[16,32], index: 15, kind: input, shape index: {}]
  %s16 = inlined_call_operand.hbm [shape: u32[16,32], index: 16, kind: input, shape index: {}]
  %s17 = inlined_call_operand.hbm [shape: u32[16,32], index: 17, kind: input, shape index: {}]
  %s18 = inlined_call_operand.vmem [shape: f32[16,8], index: 18, kind: output, shape index: {}]
  %s19 = sld [smem:[#allocation0]]
  $region157: #{tpu_custom_call.1} parent=0
    _
  %s21 = ssub.s32 1, %s19
  %s22 = scalar_select 0, %s21, %s19
  $region1: #{tpu_custom_call.1} parent=0
    #allocation2 [shape = 'u8[8192]{0}', space=vmem, size = 0x2000, scoped, tag = 'input window, operand 0']
    #allocation3 [shape = 's32[2]{0}', space=sflag, size = 0x8, scoped, tag = 'scoped memory for tpu_custom_call.1']
    #allocation4 [shape = 'u8[8192]{0}', space=vmem, size = 0x2000, scoped, tag = 'input window, operand 1, single buffered']
    #allocation5 [shape = 's32[1]{0}', space=sflag, size = 0x4, scoped, tag = 'scoped memory for tpu_custom_call.1']
    #allocation6 [shape = 'u8[512]{0}', space=vmem, size = 0x400, scoped, tag = 'input window, operand 4, single buffered']
    #allocation7 [shape = 'u8[16384]{0}', space=vmem, size = 0x4000, scoped, tag = 'input window, operand 5, single buffered']
    #allocation8 [shape = 's32[1]{0}', space=sflag, size = 0x4, scoped, tag = 'scoped memory for tpu_custom_call.1']
    #allocation9 [shape = 'u8[512]{0}', space=vmem, size = 0x400, scoped, tag = 'input window, operand 6, single buffered']
    #allocation10 [shape = 'u8[16384]{0}', space=vmem, size = 0x4000, scoped, tag = 'input window, operand 7, single buffered']
    #allocation11 [shape = 's32[1]{0}', space=sflag, size = 0x4, scoped, tag = 'scoped memory for tpu_custom_call.1']
    #allocation12 [shape = 'u8[512]{0}', space=vmem, size = 0x400, scoped, tag = 'input window, operand 8, single buffered']
    #allocation13 [shape = 'u8[16384]{0}', space=vmem, size = 0x4000, scoped, tag = 'input window, operand 9, single buffered']
    #allocation14 [shape = 's32[1]{0}', space=sflag, size = 0x4, scoped, tag = 'scoped memory for tpu_custom_call.1']
    #allocation15 [shape = 'u8[512]{0}', space=vmem, size = 0x400, scoped, tag = 'input window, operand 10, single buffered']
    #allocation16 [shape = 'u8[512]{0}', space=vmem, size = 0x400, scoped, tag = 'input window, operand 12, single buffered']
    #allocation17 [shape = 's32[1]{0}', space=sflag, size = 0x4, scoped, tag = 'scoped memory for tpu_custom_call.1']
    #allocation18 [shape = 'u8[8192]{0}', space=vmem, size = 0x2000, scoped, tag = 'input window, operand 15']
    #allocation19 [shape = 'u8[8192]{0}', space=vmem, size = 0x2000, scoped, tag = 'input window, operand 16']
    #allocation20 [shape = 'u8[8192]{0}', space=vmem, size = 0x2000, scoped, tag = 'input window, operand 17']
    %23 = vsyncpa [#allocation3], 0
    %s24 = scalar_lea.sflag [#allocation3], 1
    %25 = vsyncpa %s24, 0
    %26 = vsyncpa [#allocation5], 0
    %27 = vsyncpa [#allocation8], 0
    %28 = vsyncpa [#allocation11], 0
    %29 = vsyncpa [#allocation14], 0
    %30 = vsyncpa [#allocation17], 0
    loop: start=0, step=1, limit=4
    $region2: #{tpu_custom_call.1} parent=1 // loop_pre_header
      _
    $region3: #{tpu_custom_call.1} parent=1 // loop_header
      %s32 = sphi 0, %s36
      %p33 = scmp.ge.s32.totalorder %s32, 4
      %s42 = sphi 0, %s44
      %s45 = sphi 0, %s42
      %s46 = sphi 0, %s45
      %s62 = sphi 0, %s46
      %s66 = sphi 0, %s66
      %s68 = sphi 0, %s66
      %s69 = sphi 0, %s68
      %s83 = sphi 0, %s69
      %s87 = sphi 0, %s87
      %s89 = sphi 0, %s87
      %s90 = sphi 0, %s89
      %s104 = sphi 0, %s90
      %s108 = sphi 0, %s108
      %s110 = sphi 0, %s108
      %s111 = sphi 0, %s110
      %s125 = sphi 0, %s111
      %s129 = sphi 0, %s129
      %s131 = sphi 0, %s129
      %s132 = sphi 0, %s131
      %s146 = sphi 0, %s132
      %s150 = sphi 0, %s150
      %s152 = sphi 0, %s150
      %s153 = sphi 0, %s152
      %s167 = sphi 0, %s153
      %s171 = sphi 0, %s171
      %s173 = sphi 0, %s171
      %s174 = sphi 0, %s173
      %s188 = sphi 0, %s174
      %s192 = sphi 0, %s192
      %s194 = sphi 0, %s192
      %s195 = sphi 0, %s194
      %s209 = sphi 0, %s195
      %s213 = sphi 0, %s213
      %s215 = sphi 0, %s213
      %s216 = sphi 0, %s215
      %s230 = sphi 0, %s216
      %s234 = sphi 0, %s234
      %s236 = sphi 0, %s234
      %s237 = sphi 0, %s236
      %s251 = sphi 0, %s237
      %s255 = sphi 0, %s255
      %s257 = sphi 0, %s255
      %s258 = sphi 0, %s257
      %s272 = sphi 0, %s258
      %s276 = sphi 0, %s276
      %s278 = sphi 0, %s276
      %s279 = sphi 0, %s278
      %s293 = sphi 0, %s279
      %s297 = sphi 0, %s297
      %s299 = sphi 0, %s297
      %s300 = sphi 0, %s299
      %s314 = sphi 0, %s300
      %s320 = sphi 0, %s322
      %s323 = sphi 0, %s320
      %s324 = sphi 0, %s323
      %s340 = sphi 0, %s324
      %s346 = sphi 0, %s348
      %s349 = sphi 0, %s346
      %s350 = sphi 0, %s349
      %s366 = sphi 0, %s350
      %s372 = sphi 0, %s374
      %s375 = sphi 0, %s372
      %s376 = sphi 0, %s375
      %s392 = sphi 0, %s376
      %s398 = sphi 0, %s400
      %s401 = sphi 0, %s398
      %s402 = sphi 0, %s401
      %s418 = sphi 0, %s402
      %s424 = sphi 0, %s426
      %s427 = sphi 0, %s424
      %s428 = sphi 0, %s427
      %s444 = sphi 0, %s428
      %s450 = sphi 0, %s452
      %s453 = sphi 0, %s450
      %s454 = sphi 0, %s453
      %s470 = sphi 0, %s454
    $region4: #{tpu_custom_call.1} parent=1 // loop_header_branch
      %35 = sbr.rel (%p33) target = $region8
    $region5: #{tpu_custom_call.1} parent=1 // loop_body
      %s37 = ssub.s32 %s32, 1
      %s38 = ssub.s32 %s32, 2
      %s39 = sadd.s32 %s32, 1
      %s40 = ssub.s32 %s32, %s39
      %p41 = scmp.eq.s32.totalorder %s40, 0
      %s43 = sadd.s32 %s42, 1
      %s44 = scalar_select %p41, %s42, %s43
      %p47 = pneg %p41
      %p48 = scmp.eq.s32.totalorder %s32, 1
      %p49 = por %p47, %p48
      %p50 = scmp.ne.s32.totalorder %s42, %s45
      %p51 = scmp.eq.s32.totalorder %s32, 0
      %p52 = por %p50, %p51
      %p53 = scmp.ne.s32.totalorder %s42, %s45
      %p54 = scmp.eq.s32.totalorder %s37, 1
      %p55 = por %p53, %p54
      %p56 = scmp.ne.s32.totalorder %s45, %s46
      %p57 = scmp.eq.s32.totalorder %s37, 0
      %p58 = por %p56, %p57
      %p59 = scmp.ne.s32.totalorder %s45, %s46
      %p60 = scmp.eq.s32.totalorder %s38, 1
      %p61 = por %p59, %p60
      %p63 = scmp.ne.s32.totalorder %s46, %s62
      %p64 = scmp.eq.s32.totalorder %s38, 0
      %p65 = por %p63, %p64
      %s67 = sadd.s32 %s66, 1
      %p70 = scmp.eq.s32.totalorder %s32, 1
      %p71 = scmp.ne.s32.totalorder %s66, %s68
      %p72 = scmp.eq.s32.totalorder %s32, 0
      %p73 = por %p71, %p72
      %p74 = scmp.ne.s32.totalorder %s66, %s68
      %p75 = scmp.eq.s32.totalorder %s37, 1
      %p76 = por %p74, %p75
      %p77 = scmp.ne.s32.totalorder %s68, %s69
      %p78 = scmp.eq.s32.totalorder %s37, 0
      %p79 = por %p77, %p78
      %p80 = scmp.ne.s32.totalorder %s68, %s69
      %p81 = scmp.eq.s32.totalorder %s38, 1
      %p82 = por %p80, %p81
      %p84 = scmp.ne.s32.totalorder %s69, %s83
      %p85 = scmp.eq.s32.totalorder %s38, 0
      %p86 = por %p84, %p85
      %s88 = sadd.s32 %s87, 1
      %p91 = scmp.eq.s32.totalorder %s32, 1
      %p92 = scmp.ne.s32.totalorder %s87, %s89
      %p93 = scmp.eq.s32.totalorder %s32, 0
      %p94 = por %p92, %p93
      %p95 = scmp.ne.s32.totalorder %s87, %s89
      %p96 = scmp.eq.s32.totalorder %s37, 1
      %p97 = por %p95, %p96
      %p98 = scmp.ne.s32.totalorder %s89, %s90
      %p99 = scmp.eq.s32.totalorder %s37, 0
      %p100 = por %p98, %p99
      %p101 = scmp.ne.s32.totalorder %s89, %s90
      %p102 = scmp.eq.s32.totalorder %s38, 1
      %p103 = por %p101, %p102
      %p105 = scmp.ne.s32.totalorder %s90, %s104
      %p106 = scmp.eq.s32.totalorder %s38, 0
      %p107 = por %p105, %p106
      %s109 = sadd.s32 %s108, 1
      %p112 = scmp.eq.s32.totalorder %s32, 1
      %p113 = scmp.ne.s32.totalorder %s108, %s110
      %p114 = scmp.eq.s32.totalorder %s32, 0
      %p115 = por %p113, %p114
      %p116 = scmp.ne.s32.totalorder %s108, %s110
      %p117 = scmp.eq.s32.totalorder %s37, 1
      %p118 = por %p116, %p117
      %p119 = scmp.ne.s32.totalorder %s110, %s111
      %p120 = scmp.eq.s32.totalorder %s37, 0
      %p121 = por %p119, %p120
      %p122 = scmp.ne.s32.totalorder %s110, %s111
      %p123 = scmp.eq.s32.totalorder %s38, 1
      %p124 = por %p122, %p123
      %p126 = scmp.ne.s32.totalorder %s111, %s125
      %p127 = scmp.eq.s32.totalorder %s38, 0
      %p128 = por %p126, %p127
      %s130 = sadd.s32 %s129, 1
      %p133 = scmp.eq.s32.totalorder %s32, 1
      %p134 = scmp.ne.s32.totalorder %s129, %s131
      %p135 = scmp.eq.s32.totalorder %s32, 0
      %p136 = por %p134, %p135
      %p137 = scmp.ne.s32.totalorder %s129, %s131
      %p138 = scmp.eq.s32.totalorder %s37, 1
      %p139 = por %p137, %p138
      %p140 = scmp.ne.s32.totalorder %s131, %s132
      %p141 = scmp.eq.s32.totalorder %s37, 0
      %p142 = por %p140, %p141
      %p143 = scmp.ne.s32.totalorder %s131, %s132
      %p144 = scmp.eq.s32.totalorder %s38, 1
      %p145 = por %p143, %p144
      %p147 = scmp.ne.s32.totalorder %s132, %s146
      %p148 = scmp.eq.s32.totalorder %s38, 0
      %p149 = por %p147, %p148
      %s151 = sadd.s32 %s150, 1
      %p154 = scmp.eq.s32.totalorder %s32, 1
      %p155 = scmp.ne.s32.totalorder %s150, %s152
      %p156 = scmp.eq.s32.totalorder %s32, 0
      %p157 = por %p155, %p156
      %p158 = scmp.ne.s32.totalorder %s150, %s152
      %p159 = scmp.eq.s32.totalorder %s37, 1
      %p160 = por %p158, %p159
      %p161 = scmp.ne.s32.totalorder %s152, %s153
      %p162 = scmp.eq.s32.totalorder %s37, 0
      %p163 = por %p161, %p162
      %p164 = scmp.ne.s32.totalorder %s152, %s153
      %p165 = scmp.eq.s32.totalorder %s38, 1
      %p166 = por %p164, %p165
      %p168 = scmp.ne.s32.totalorder %s153, %s167
      %p169 = scmp.eq.s32.totalorder %s38, 0
      %p170 = por %p168, %p169
      %s172 = sadd.s32 %s171, 1
      %p175 = scmp.eq.s32.totalorder %s32, 1
      %p176 = scmp.ne.s32.totalorder %s171, %s173
      %p177 = scmp.eq.s32.totalorder %s32, 0
      %p178 = por %p176, %p177
      %p179 = scmp.ne.s32.totalorder %s171, %s173
      %p180 = scmp.eq.s32.totalorder %s37, 1
      %p181 = por %p179, %p180
      %p182 = scmp.ne.s32.totalorder %s173, %s174
      %p183 = scmp.eq.s32.totalorder %s37, 0
      %p184 = por %p182, %p183
      %p185 = scmp.ne.s32.totalorder %s173, %s174
      %p186 = scmp.eq.s32.totalorder %s38, 1
      %p187 = por %p185, %p186
      %p189 = scmp.ne.s32.totalorder %s174, %s188
      %p190 = scmp.eq.s32.totalorder %s38, 0
      %p191 = por %p189, %p190
      %s193 = sadd.s32 %s192, 1
      %p196 = scmp.eq.s32.totalorder %s32, 1
      %p197 = scmp.ne.s32.totalorder %s192, %s194
      %p198 = scmp.eq.s32.totalorder %s32, 0
      %p199 = por %p197, %p198
      %p200 = scmp.ne.s32.totalorder %s192, %s194
      %p201 = scmp.eq.s32.totalorder %s37, 1
      %p202 = por %p200, %p201
      %p203 = scmp.ne.s32.totalorder %s194, %s195
      %p204 = scmp.eq.s32.totalorder %s37, 0
      %p205 = por %p203, %p204
      %p206 = scmp.ne.s32.totalorder %s194, %s195
      %p207 = scmp.eq.s32.totalorder %s38, 1
      %p208 = por %p206, %p207
      %p210 = scmp.ne.s32.totalorder %s195, %s209
      %p211 = scmp.eq.s32.totalorder %s38, 0
      %p212 = por %p210, %p211
      %s214 = sadd.s32 %s213, 1
      %p217 = scmp.eq.s32.totalorder %s32, 1
      %p218 = scmp.ne.s32.totalorder %s213, %s215
      %p219 = scmp.eq.s32.totalorder %s32, 0
      %p220 = por %p218, %p219
      %p221 = scmp.ne.s32.totalorder %s213, %s215
      %p222 = scmp.eq.s32.totalorder %s37, 1
      %p223 = por %p221, %p222
      %p224 = scmp.ne.s32.totalorder %s215, %s216
      %p225 = scmp.eq.s32.totalorder %s37, 0
      %p226 = por %p224, %p225
      %p227 = scmp.ne.s32.totalorder %s215, %s216
      %p228 = scmp.eq.s32.totalorder %s38, 1
      %p229 = por %p227, %p228
      %p231 = scmp.ne.s32.totalorder %s216, %s230
      %p232 = scmp.eq.s32.totalorder %s38, 0
      %p233 = por %p231, %p232
      %s235 = sadd.s32 %s234, 1
      %p238 = scmp.eq.s32.totalorder %s32, 1
      %p239 = scmp.ne.s32.totalorder %s234, %s236
      %p240 = scmp.eq.s32.totalorder %s32, 0
      %p241 = por %p239, %p240
      %p242 = scmp.ne.s32.totalorder %s234, %s236
      %p243 = scmp.eq.s32.totalorder %s37, 1
      %p244 = por %p242, %p243
      %p245 = scmp.ne.s32.totalorder %s236, %s237
      %p246 = scmp.eq.s32.totalorder %s37, 0
      %p247 = por %p245, %p246
      %p248 = scmp.ne.s32.totalorder %s236, %s237
      %p249 = scmp.eq.s32.totalorder %s38, 1
      %p250 = por %p248, %p249
      %p252 = scmp.ne.s32.totalorder %s237, %s251
      %p253 = scmp.eq.s32.totalorder %s38, 0
      %p254 = por %p252, %p253
      %s256 = sadd.s32 %s255, 1
      %p259 = scmp.eq.s32.totalorder %s32, 1
      %p260 = scmp.ne.s32.totalorder %s255, %s257
      %p261 = scmp.eq.s32.totalorder %s32, 0
      %p262 = por %p260, %p261
      %p263 = scmp.ne.s32.totalorder %s255, %s257
      %p264 = scmp.eq.s32.totalorder %s37, 1
      %p265 = por %p263, %p264
      %p266 = scmp.ne.s32.totalorder %s257, %s258
      %p267 = scmp.eq.s32.totalorder %s37, 0
      %p268 = por %p266, %p267
      %p269 = scmp.ne.s32.totalorder %s257, %s258
      %p270 = scmp.eq.s32.totalorder %s38, 1
      %p271 = por %p269, %p270
      %p273 = scmp.ne.s32.totalorder %s258, %s272
      %p274 = scmp.eq.s32.totalorder %s38, 0
      %p275 = por %p273, %p274
      %s277 = sadd.s32 %s276, 1
      %p280 = scmp.eq.s32.totalorder %s32, 1
      %p281 = scmp.ne.s32.totalorder %s276, %s278
      %p282 = scmp.eq.s32.totalorder %s32, 0
      %p283 = por %p281, %p282
      %p284 = scmp.ne.s32.totalorder %s276, %s278
      %p285 = scmp.eq.s32.totalorder %s37, 1
      %p286 = por %p284, %p285
      %p287 = scmp.ne.s32.totalorder %s278, %s279
      %p288 = scmp.eq.s32.totalorder %s37, 0
      %p289 = por %p287, %p288
      %p290 = scmp.ne.s32.totalorder %s278, %s279
      %p291 = scmp.eq.s32.totalorder %s38, 1
      %p292 = por %p290, %p291
      %p294 = scmp.ne.s32.totalorder %s279, %s293
      %p295 = scmp.eq.s32.totalorder %s38, 0
      %p296 = por %p294, %p295
      %s298 = sadd.s32 %s297, 1
      %p301 = scmp.eq.s32.totalorder %s32, 1
      %p302 = scmp.ne.s32.totalorder %s297, %s299
      %p303 = scmp.eq.s32.totalorder %s32, 0
      %p304 = por %p302, %p303
      %p305 = scmp.ne.s32.totalorder %s297, %s299
      %p306 = scmp.eq.s32.totalorder %s37, 1
      %p307 = por %p305, %p306
      %p308 = scmp.ne.s32.totalorder %s299, %s300
      %p309 = scmp.eq.s32.totalorder %s37, 0
      %p310 = por %p308, %p309
      %p311 = scmp.ne.s32.totalorder %s299, %s300
      %p312 = scmp.eq.s32.totalorder %s38, 1
      %p313 = por %p311, %p312
      %p315 = scmp.ne.s32.totalorder %s300, %s314
      %p316 = scmp.eq.s32.totalorder %s38, 0
      %p317 = por %p315, %p316
      %s318 = ssub.s32 %s32, %s39
      %p319 = scmp.eq.s32.totalorder %s318, 0
      %s321 = sadd.s32 %s320, 1
      %s322 = scalar_select %p319, %s320, %s321
      %p325 = pneg %p319
      %p326 = scmp.eq.s32.totalorder %s32, 1
      %p327 = por %p325, %p326
      %p328 = scmp.ne.s32.totalorder %s320, %s323
      %p329 = scmp.eq.s32.totalorder %s32, 0
      %p330 = por %p328, %p329
      %p331 = scmp.ne.s32.totalorder %s320, %s323
      %p332 = scmp.eq.s32.totalorder %s37, 1
      %p333 = por %p331, %p332
      %p334 = scmp.ne.s32.totalorder %s323, %s324
      %p335 = scmp.eq.s32.totalorder %s37, 0
      %p336 = por %p334, %p335
      %p337 = scmp.ne.s32.totalorder %s323, %s324
      %p338 = scmp.eq.s32.totalorder %s38, 1
      %p339 = por %p337, %p338
      %p341 = scmp.ne.s32.totalorder %s324, %s340
      %p342 = scmp.eq.s32.totalorder %s38, 0
      %p343 = por %p341, %p342
      %s344 = ssub.s32 %s32, %s39
      %p345 = scmp.eq.s32.totalorder %s344, 0
      %s347 = sadd.s32 %s346, 1
      %s348 = scalar_select %p345, %s346, %s347
      %p351 = pneg %p345
      %p352 = scmp.eq.s32.totalorder %s32, 1
      %p353 = por %p351, %p352
      %p354 = scmp.ne.s32.totalorder %s346, %s349
      %p355 = scmp.eq.s32.totalorder %s32, 0
      %p356 = por %p354, %p355
      %p357 = scmp.ne.s32.totalorder %s346, %s349
      %p358 = scmp.eq.s32.totalorder %s37, 1
      %p359 = por %p357, %p358
      %p360 = scmp.ne.s32.totalorder %s349, %s350
      %p361 = scmp.eq.s32.totalorder %s37, 0
      %p362 = por %p360, %p361
      %p363 = scmp.ne.s32.totalorder %s349, %s350
      %p364 = scmp.eq.s32.totalorder %s38, 1
      %p365 = por %p363, %p364
      %p367 = scmp.ne.s32.totalorder %s350, %s366
      %p368 = scmp.eq.s32.totalorder %s38, 0
      %p369 = por %p367, %p368
      %s370 = ssub.s32 %s32, %s39
      %p371 = scmp.eq.s32.totalorder %s370, 0
      %s373 = sadd.s32 %s372, 1
      %s374 = scalar_select %p371, %s372, %s373
      %p377 = pneg %p371
      %p378 = scmp.eq.s32.totalorder %s32, 1
      %p379 = por %p377, %p378
      %p380 = scmp.ne.s32.totalorder %s372, %s375
      %p381 = scmp.eq.s32.totalorder %s32, 0
      %p382 = por %p380, %p381
      %p383 = scmp.ne.s32.totalorder %s372, %s375
      %p384 = scmp.eq.s32.totalorder %s37, 1
      %p385 = por %p383, %p384
      %p386 = scmp.ne.s32.totalorder %s375, %s376
      %p387 = scmp.eq.s32.totalorder %s37, 0
      %p388 = por %p386, %p387
      %p389 = scmp.ne.s32.totalorder %s375, %s376
      %p390 = scmp.eq.s32.totalorder %s38, 1
      %p391 = por %p389, %p390
      %p393 = scmp.ne.s32.totalorder %s376, %s392
      %p394 = scmp.eq.s32.totalorder %s38, 0
      %p395 = por %p393, %p394
      %s396 = ssub.s32 %s32, %s39
      %p397 = scmp.eq.s32.totalorder %s396, 0
      %s399 = sadd.s32 %s398, 1
      %s400 = scalar_select %p397, %s398, %s399
      %p403 = pneg %p397
      %p404 = scmp.eq.s32.totalorder %s32, 1
      %p405 = por %p403, %p404
      %p406 = scmp.ne.s32.totalorder %s398, %s401
      %p407 = scmp.eq.s32.totalorder %s32, 0
      %p408 = por %p406, %p407
      %p409 = scmp.ne.s32.totalorder %s398, %s401
      %p410 = scmp.eq.s32.totalorder %s37, 1
      %p411 = por %p409, %p410
      %p412 = scmp.ne.s32.totalorder %s401, %s402
      %p413 = scmp.eq.s32.totalorder %s37, 0
      %p414 = por %p412, %p413
      %p415 = scmp.ne.s32.totalorder %s401, %s402
      %p416 = scmp.eq.s32.totalorder %s38, 1
      %p417 = por %p415, %p416
      %p419 = scmp.ne.s32.totalorder %s402, %s418
      %p420 = scmp.eq.s32.totalorder %s38, 0
      %p421 = por %p419, %p420
      %s422 = ssub.s32 %s32, %s39
      %p423 = scmp.eq.s32.totalorder %s422, 0
      %s425 = sadd.s32 %s424, 1
      %s426 = scalar_select %p423, %s424, %s425
      %p429 = pneg %p423
      %p430 = scmp.eq.s32.totalorder %s32, 1
      %p431 = por %p429, %p430
      %p432 = scmp.ne.s32.totalorder %s424, %s427
      %p433 = scmp.eq.s32.totalorder %s32, 0
      %p434 = por %p432, %p433
      %p435 = scmp.ne.s32.totalorder %s424, %s427
      %p436 = scmp.eq.s32.totalorder %s37, 1
      %p437 = por %p435, %p436
      %p438 = scmp.ne.s32.totalorder %s427, %s428
      %p439 = scmp.eq.s32.totalorder %s37, 0
      %p440 = por %p438, %p439
      %p441 = scmp.ne.s32.totalorder %s427, %s428
      %p442 = scmp.eq.s32.totalorder %s38, 1
      %p443 = por %p441, %p442
      %p445 = scmp.ne.s32.totalorder %s428, %s444
      %p446 = scmp.eq.s32.totalorder %s38, 0
      %p447 = por %p445, %p446
      %s448 = ssub.s32 %s32, %s39
      %p449 = scmp.eq.s32.totalorder %s448, 0
      %s451 = sadd.s32 %s450, 1
      %s452 = scalar_select %p449, %s450, %s451
      %p455 = pneg %p449
      %p456 = scmp.eq.s32.totalorder %s32, 1
      %p457 = por %p455, %p456
      %p458 = scmp.ne.s32.totalorder %s450, %s453
      %p459 = scmp.eq.s32.totalorder %s32, 0
      %p460 = por %p458, %p459
      %p461 = scmp.ne.s32.totalorder %s450, %s453
      %p462 = scmp.eq.s32.totalorder %s37, 1
      %p463 = por %p461, %p462
      %p464 = scmp.ne.s32.totalorder %s453, %s454
      %p465 = scmp.eq.s32.totalorder %s37, 0
      %p466 = por %p464, %p465
      %p467 = scmp.ne.s32.totalorder %s453, %s454
      %p468 = scmp.eq.s32.totalorder %s38, 1
      %p469 = por %p467, %p468
      %p471 = scmp.ne.s32.totalorder %s454, %s470
      %p472 = scmp.eq.s32.totalorder %s38, 0
      %p473 = por %p471, %p472
      %p474 = scmp.le.s32.totalorder 1, %s32
      %p475 = scmp.lt.s32.totalorder %s32, 3
      %p476 = pnand %p474, %p475
      %p477 = pneg %p476
      // Predicated region
      $region9: #{tpu_custom_call.1} parent=5 // pred_check
        _
      $region10: #{tpu_custom_call.1} parent=5 // pred_check_branch
        %479 = sbr.rel (%p476) target = $region12
      $region11: #{tpu_custom_call.1} parent=5 // pred_region
        %s480 = ssub.s32 %s32, 1
        // Predicated region
        $region13: #{tpu_custom_call.1} parent=11 // pred_check
          %p481 = pneg %p79
        $region14: #{tpu_custom_call.1} parent=11 // pred_check_branch
          %483 = sbr.rel (%p481) target = $region16
        $region15: #{tpu_custom_call.1} parent=11 // pred_region
          %s485 = ssub.s32 256, 256
          %486 = vsyncadd [#allocation5], %s485
          %s487 = sshll.u32 [#allocation4], 4
          %s488 = int_to_ptr.vmem [resolvable:$true] %s487
          %493 = dma.hbm_to_vmem [thread:$0]  %s1, 256, %s488, [#allocation5], 128, 128, 8
        $region16: #{tpu_custom_call.1} parent=11 // pred_fallthru
          _
        // Predicated region
        $region17: #{tpu_custom_call.1} parent=11 // pred_check
          %p494 = pneg %p100
        $region18: #{tpu_custom_call.1} parent=11 // pred_check_branch
          %496 = sbr.rel (%p494) target = $region20
        $region19: #{tpu_custom_call.1} parent=11 // pred_region
          _
        $region20: #{tpu_custom_call.1} parent=11 // pred_fallthru
          _
        // Predicated region
        $region21: #{tpu_custom_call.1} parent=11 // pred_check
          %p497 = pneg %p121
        $region22: #{tpu_custom_call.1} parent=11 // pred_check_branch
          %499 = sbr.rel (%p497) target = $region24
        $region23: #{tpu_custom_call.1} parent=11 // pred_region
          _
        $region24: #{tpu_custom_call.1} parent=11 // pred_fallthru
          _
        // Predicated region
        $region25: #{tpu_custom_call.1} parent=11 // pred_check
          %p500 = pneg %p142
        $region26: #{tpu_custom_call.1} parent=11 // pred_check_branch
          %502 = sbr.rel (%p500) target = $region28
        $region27: #{tpu_custom_call.1} parent=11 // pred_region
          %s504 = ssub.s32 16, 16
          %505 = vsyncadd [#allocation5], %s504
          %s507 = sshll.u32 [#allocation6], 4
          %s508 = int_to_ptr.vmem [resolvable:$true] %s507
          %510 = dma.hbm_to_vmem [thread:$0]  %s4, 16, %s508, [#allocation5]
        $region28: #{tpu_custom_call.1} parent=11 // pred_fallthru
          _
        // Predicated region
        $region29: #{tpu_custom_call.1} parent=11 // pred_check
          %p511 = pneg %p163
        $region30: #{tpu_custom_call.1} parent=11 // pred_check_branch
          %513 = sbr.rel (%p511) target = $region32
        $region31: #{tpu_custom_call.1} parent=11 // pred_region
          %s515 = ssub.s32 512, 512
          %516 = vsyncadd [#allocation8], %s515
          %s517 = sshll.u32 [#allocation7], 4
          %s518 = int_to_ptr.vmem [resolvable:$true] %s517
          %523 = dma.hbm_to_vmem [thread:$0]  %s5, 512, %s518, [#allocation8], 128, 128, 8
        $region32: #{tpu_custom_call.1} parent=11 // pred_fallthru
          _
        // Predicated region
        $region33: #{tpu_custom_call.1} parent=11 // pred_check
          %p524 = pneg %p184
        $region34: #{tpu_custom_call.1} parent=11 // pred_check_branch
          %526 = sbr.rel (%p524) target = $region36
        $region35: #{tpu_custom_call.1} parent=11 // pred_region
          %s528 = ssub.s32 16, 16
          %529 = vsyncadd [#allocation8], %s528
          %s531 = sshll.u32 [#allocation9], 4
          %s532 = int_to_ptr.vmem [resolvable:$true] %s531
          %534 = dma.hbm_to_vmem [thread:$0]  %s6, 16, %s532, [#allocation8]
        $region36: #{tpu_custom_call.1} parent=11 // pred_fallthru
          _
        // Predicated region
        $region37: #{tpu_custom_call.1} parent=11 // pred_check
          %p535 = pneg %p205
        $region38: #{tpu_custom_call.1} parent=11 // pred_check_branch
          %537 = sbr.rel (%p535) target = $region40
        $region39: #{tpu_custom_call.1} parent=11 // pred_region
          %s539 = ssub.s32 512, 512
          %540 = vsyncadd [#allocation11], %s539
          %s541 = sshll.u32 [#allocation10], 4
          %s542 = int_to_ptr.vmem [resolvable:$true] %s541
          %547 = dma.hbm_to_vmem [thread:$0]  %s7, 512, %s542, [#allocation11], 128, 128, 8
        $region40: #{tpu_custom_call.1} parent=11 // pred_fallthru
          _
        // Predicated region
        $region41: #{tpu_custom_call.1} parent=11 // pred_check
          %p548 = pneg %p226
        $region42: #{tpu_custom_call.1} parent=11 // pred_check_branch
          %550 = sbr.rel (%p548) target = $region44
        $region43: #{tpu_custom_call.1} parent=11 // pred_region
          %s552 = ssub.s32 16, 16
          %553 = vsyncadd [#allocation11], %s552
          %s555 = sshll.u32 [#allocation12], 4
          %s556 = int_to_ptr.vmem [resolvable:$true] %s555
          %558 = dma.hbm_to_vmem [thread:$0]  %s8, 16, %s556, [#allocation11]
        $region44: #{tpu_custom_call.1} parent=11 // pred_fallthru
          _
        // Predicated region
        $region45: #{tpu_custom_call.1} parent=11 // pred_check
          %p559 = pneg %p247
        $region46: #{tpu_custom_call.1} parent=11 // pred_check_branch
          %561 = sbr.rel (%p559) target = $region48
        $region47: #{tpu_custom_call.1} parent=11 // pred_region
          %s563 = ssub.s32 512, 512
          %564 = vsyncadd [#allocation14], %s563
          %s565 = sshll.u32 [#allocation13], 4
          %s566 = int_to_ptr.vmem [resolvable:$true] %s565
          %571 = dma.hbm_to_vmem [thread:$0]  %s9, 512, %s566, [#allocation14], 128, 128, 8
        $region48: #{tpu_custom_call.1} parent=11 // pred_fallthru
          _
        // Predicated region
        $region49: #{tpu_custom_call.1} parent=11 // pred_check
          %p572 = pneg %p268
        $region50: #{tpu_custom_call.1} parent=11 // pred_check_branch
          %574 = sbr.rel (%p572) target = $region52
        $region51: #{tpu_custom_call.1} parent=11 // pred_region
          %s576 = ssub.s32 16, 16
          %577 = vsyncadd [#allocation14], %s576
          %s579 = sshll.u32 [#allocation15], 4
          %s580 = int_to_ptr.vmem [resolvable:$true] %s579
          %582 = dma.hbm_to_vmem [thread:$0]  %s10, 16, %s580, [#allocation14]
        $region52: #{tpu_custom_call.1} parent=11 // pred_fallthru
          _
        // Predicated region
        $region53: #{tpu_custom_call.1} parent=11 // pred_check
          %p583 = pneg %p289
        $region54: #{tpu_custom_call.1} parent=11 // pred_check_branch
          %585 = sbr.rel (%p583) target = $region56
        $region55: #{tpu_custom_call.1} parent=11 // pred_region
          _
        $region56: #{tpu_custom_call.1} parent=11 // pred_fallthru
          _
        // Predicated region
        $region57: #{tpu_custom_call.1} parent=11 // pred_check
          %p586 = pneg %p310
        $region58: #{tpu_custom_call.1} parent=11 // pred_check_branch
          %588 = sbr.rel (%p586) target = $region60
        $region59: #{tpu_custom_call.1} parent=11 // pred_region
          %s590 = ssub.s32 16, 16
          %591 = vsyncadd [#allocation17], %s590
          %s593 = sshll.u32 [#allocation16], 4
          %s594 = int_to_ptr.vmem [resolvable:$true] %s593
          %596 = dma.hbm_to_vmem [thread:$0]  %s12, 16, %s594, [#allocation17]
        $region60: #{tpu_custom_call.1} parent=11 // pred_fallthru
          _
      $region12: #{tpu_custom_call.1} parent=5 // pred_fallthru
        _
      %p597 = scmp.lt.s32.totalorder %s32, 2
      // Predicated region
      $region61: #{tpu_custom_call.1} parent=5 // pred_check
        %p598 = pneg %p597
      $region62: #{tpu_custom_call.1} parent=5 // pred_check_branch
        %600 = sbr.rel (%p598) target = $region64
      $region63: #{tpu_custom_call.1} parent=5 // pred_region
        // Predicated region
        $region65: #{tpu_custom_call.1} parent=63 // pred_check
          %p601 = pneg %p52
        $region66: #{tpu_custom_call.1} parent=63 // pred_check_branch
          %603 = sbr.rel (%p601) target = $region68
        $region67: #{tpu_custom_call.1} parent=63 // pred_region
          %s604 = sand.u32 %s32, 1
          %s605 = scalar_lea.sflag [#allocation3], %s604
          %s606 = sand.u32 %s42, 1
          %s607 = smul.addr %s606, 8
          %s608 = scalar_lea.vmem [#allocation2], %s607
          %s610 = ssub.s32 128, 128
          %611 = vsyncadd %s605, %s610
          %s612 = smul.addr %s32, 128
          %s613 = scalar_lea.hbm %s0, %s612
          %s615 = sshll.u32 %s608, 4
          %s616 = int_to_ptr.vmem [resolvable:$true] %s615
          %618 = dma.hbm_to_vmem [thread:$0]  %s613, 128, %s616, %s605
        $region68: #{tpu_custom_call.1} parent=63 // pred_fallthru
          _
        // Predicated region
        $region69: #{tpu_custom_call.1} parent=63 // pred_check
          %p619 = pneg %p330
        $region70: #{tpu_custom_call.1} parent=63 // pred_check_branch
          %621 = sbr.rel (%p619) target = $region72
        $region71: #{tpu_custom_call.1} parent=63 // pred_region
          %p622 = scmp.lt.s32.totalorder %s32, 1
          %s623 = scalar_select %p622, %s32, 1
          %s624 = smul.addr %s623, 8
          %s625 = scalar_lea.vmem %s13, %s624
        $region72: #{tpu_custom_call.1} parent=63 // pred_fallthru
          _
        // Predicated region
        $region73: #{tpu_custom_call.1} parent=63 // pred_check
          %p626 = pneg %p356
        $region74: #{tpu_custom_call.1} parent=63 // pred_check_branch
          %628 = sbr.rel (%p626) target = $region76
        $region75: #{tpu_custom_call.1} parent=63 // pred_region
          %p629 = scmp.lt.s32.totalorder %s32, 1
          %s630 = scalar_select %p629, %s32, 1
          %s631 = smul.addr %s630, 8
          %s632 = scalar_lea.vmem %s14, %s631
        $region76: #{tpu_custom_call.1} parent=63 // pred_fallthru
          _
        // Predicated region
        $region77: #{tpu_custom_call.1} parent=63 // pred_check
          %p633 = pneg %p382
        $region78: #{tpu_custom_call.1} parent=63 // pred_check_branch
          %635 = sbr.rel (%p633) target = $region80
        $region79: #{tpu_custom_call.1} parent=63 // pred_region
          %s636 = sand.u32 %s32, 1
          %s637 = scalar_lea.sflag [#allocation3], %s636
          %s638 = sand.u32 %s372, 1
          %s639 = smul.addr %s638, 8
          %s640 = scalar_lea.vmem [#allocation18], %s639
          %s642 = ssub.s32 128, 128
          %643 = vsyncadd %s637, %s642
          %s644 = smul.addr %s32, 128
          %s645 = scalar_lea.hbm %s15, %s644
          %s647 = sshll.u32 %s640, 4
          %s648 = int_to_ptr.vmem [resolvable:$true] %s647
          %650 = dma.hbm_to_vmem [thread:$0]  %s645, 128, %s648, %s637
        $region80: #{tpu_custom_call.1} parent=63 // pred_fallthru
          _
        // Predicated region
        $region81: #{tpu_custom_call.1} parent=63 // pred_check
          %p651 = pneg %p408
        $region82: #{tpu_custom_call.1} parent=63 // pred_check_branch
          %653 = sbr.rel (%p651) target = $region84
        $region83: #{tpu_custom_call.1} parent=63 // pred_region
          %s654 = sand.u32 %s32, 1
          %s655 = scalar_lea.sflag [#allocation3], %s654
          %s656 = sand.u32 %s398, 1
          %s657 = smul.addr %s656, 8
          %s658 = scalar_lea.vmem [#allocation19], %s657
          %s660 = ssub.s32 128, 128
          %661 = vsyncadd %s655, %s660
          %s662 = smul.addr %s32, 128
          %s663 = scalar_lea.hbm %s16, %s662
          %s665 = sshll.u32 %s658, 4
          %s666 = int_to_ptr.vmem [resolvable:$true] %s665
          %668 = dma.hbm_to_vmem [thread:$0]  %s663, 128, %s666, %s655
        $region84: #{tpu_custom_call.1} parent=63 // pred_fallthru
          _
        // Predicated region
        $region85: #{tpu_custom_call.1} parent=63 // pred_check
          %p669 = pneg %p434
        $region86: #{tpu_custom_call.1} parent=63 // pred_check_branch
          %671 = sbr.rel (%p669) target = $region88
        $region87: #{tpu_custom_call.1} parent=63 // pred_region
          %s672 = sand.u32 %s32, 1
          %s673 = scalar_lea.sflag [#allocation3], %s672
          %s674 = sand.u32 %s424, 1
          %s675 = smul.addr %s674, 8
          %s676 = scalar_lea.vmem [#allocation20], %s675
          %s678 = ssub.s32 128, 128
          %679 = vsyncadd %s673, %s678
          %s680 = smul.addr %s32, 128
          %s681 = scalar_lea.hbm %s17, %s680
          %s683 = sshll.u32 %s676, 4
          %s684 = int_to_ptr.vmem [resolvable:$true] %s683
          %686 = dma.hbm_to_vmem [thread:$0]  %s681, 128, %s684, %s673
        $region88: #{tpu_custom_call.1} parent=63 // pred_fallthru
          _
      $region64: #{tpu_custom_call.1} parent=5 // pred_fallthru
        _
      %p687 = scmp.le.s32.totalorder 1, %s32
      %p688 = scmp.lt.s32.totalorder %s32, 3
      %p689 = pnand %p687, %p688
      %p690 = pneg %p689
      // Predicated region
      $region89: #{tpu_custom_call.1} parent=5 // pred_check
        _
      $region90: #{tpu_custom_call.1} parent=5 // pred_check_branch
        %692 = sbr.rel (%p689) target = $region92
      $region91: #{tpu_custom_call.1} parent=5 // pred_region
        %s693 = ssub.s32 %s32, 1
        %s694 = sand.u32 %s37, 1
        %s695 = scalar_lea.sflag [#allocation3], %s694
        %s696 = sand.u32 %s45, 1
        %s697 = smul.addr %s696, 8
        %s698 = scalar_lea.vmem [#allocation2], %s697
        // Predicated region
        $region93: #{tpu_custom_call.1} parent=91 // pred_check
          %p699 = pneg %p58
        $region94: #{tpu_custom_call.1} parent=91 // pred_check_branch
          %701 = sbr.rel (%p699) target = $region96
        $region95: #{tpu_custom_call.1} parent=91 // pred_region
          %702 = dma.done %s695, 128
        $region96: #{tpu_custom_call.1} parent=91 // pred_fallthru
          _
        // Predicated region
        $region97: #{tpu_custom_call.1} parent=91 // pred_check
          %p703 = pneg %p79
        $region98: #{tpu_custom_call.1} parent=91 // pred_check_branch
          %705 = sbr.rel (%p703) target = $region100
        $region99: #{tpu_custom_call.1} parent=91 // pred_region
          %706 = dma.done [#allocation5], 256
        $region100: #{tpu_custom_call.1} parent=91 // pred_fallthru
          _
        // Predicated region
        $region101: #{tpu_custom_call.1} parent=91 // pred_check
          %p707 = pneg %p142
        $region102: #{tpu_custom_call.1} parent=91 // pred_check_branch
          %709 = sbr.rel (%p707) target = $region104
        $region103: #{tpu_custom_call.1} parent=91 // pred_region
          %710 = dma.done [#allocation5], 16
        $region104: #{tpu_custom_call.1} parent=91 // pred_fallthru
          _
        // Predicated region
        $region105: #{tpu_custom_call.1} parent=91 // pred_check
          %p711 = pneg %p163
        $region106: #{tpu_custom_call.1} parent=91 // pred_check_branch
          %713 = sbr.rel (%p711) target = $region108
        $region107: #{tpu_custom_call.1} parent=91 // pred_region
          %714 = dma.done [#allocation8], 512
        $region108: #{tpu_custom_call.1} parent=91 // pred_fallthru
          _
        // Predicated region
        $region109: #{tpu_custom_call.1} parent=91 // pred_check
          %p715 = pneg %p184
        $region110: #{tpu_custom_call.1} parent=91 // pred_check_branch
          %717 = sbr.rel (%p715) target = $region112
        $region111: #{tpu_custom_call.1} parent=91 // pred_region
          %718 = dma.done [#allocation8], 16
        $region112: #{tpu_custom_call.1} parent=91 // pred_fallthru
          _
        // Predicated region
        $region113: #{tpu_custom_call.1} parent=91 // pred_check
          %p719 = pneg %p205
        $region114: #{tpu_custom_call.1} parent=91 // pred_check_branch
          %721 = sbr.rel (%p719) target = $region116
        $region115: #{tpu_custom_call.1} parent=91 // pred_region
          %722 = dma.done [#allocation11], 512
        $region116: #{tpu_custom_call.1} parent=91 // pred_fallthru
          _
        // Predicated region
        $region117: #{tpu_custom_call.1} parent=91 // pred_check
          %p723 = pneg %p226
        $region118: #{tpu_custom_call.1} parent=91 // pred_check_branch
          %725 = sbr.rel (%p723) target = $region120
        $region119: #{tpu_custom_call.1} parent=91 // pred_region
          %726 = dma.done [#allocation11], 16
        $region120: #{tpu_custom_call.1} parent=91 // pred_fallthru
          _
        // Predicated region
        $region121: #{tpu_custom_call.1} parent=91 // pred_check
          %p727 = pneg %p247
        $region122: #{tpu_custom_call.1} parent=91 // pred_check_branch
          %729 = sbr.rel (%p727) target = $region124
        $region123: #{tpu_custom_call.1} parent=91 // pred_region
          %730 = dma.done [#allocation14], 512
        $region124: #{tpu_custom_call.1} parent=91 // pred_fallthru
          _
        // Predicated region
        $region125: #{tpu_custom_call.1} parent=91 // pred_check
          %p731 = pneg %p268
        $region126: #{tpu_custom_call.1} parent=91 // pred_check_branch
          %733 = sbr.rel (%p731) target = $region128
        $region127: #{tpu_custom_call.1} parent=91 // pred_region
          %734 = dma.done [#allocation14], 16
        $region128: #{tpu_custom_call.1} parent=91 // pred_fallthru
          _
        // Predicated region
        $region129: #{tpu_custom_call.1} parent=91 // pred_check
          %p735 = pneg %p310
        $region130: #{tpu_custom_call.1} parent=91 // pred_check_branch
          %737 = sbr.rel (%p735) target = $region132
        $region131: #{tpu_custom_call.1} parent=91 // pred_region
          %738 = dma.done [#allocation17], 16
        $region132: #{tpu_custom_call.1} parent=91 // pred_fallthru
          _
        %s739 = sand.u32 %s37, 1
        %s740 = scalar_lea.sflag [#allocation3], %s739
        %s741 = sand.u32 %s375, 1
        %s742 = smul.addr %s741, 8
        %s743 = scalar_lea.vmem [#allocation18], %s742
        // Predicated region
        $region133: #{tpu_custom_call.1} parent=91 // pred_check
          %p744 = pneg %p388
        $region134: #{tpu_custom_call.1} parent=91 // pred_check_branch
          %746 = sbr.rel (%p744) target = $region136
        $region135: #{tpu_custom_call.1} parent=91 // pred_region
          %747 = dma.done %s740, 128
        $region136: #{tpu_custom_call.1} parent=91 // pred_fallthru
          _
        %s748 = sand.u32 %s37, 1
        %s749 = scalar_lea.sflag [#allocation3], %s748
        %s750 = sand.u32 %s401, 1
        %s751 = smul.addr %s750, 8
        %s752 = scalar_lea.vmem [#allocation19], %s751
        // Predicated region
        $region137: #{tpu_custom_call.1} parent=91 // pred_check
          %p753 = pneg %p414
        $region138: #{tpu_custom_call.1} parent=91 // pred_check_branch
          %755 = sbr.rel (%p753) target = $region140
        $region139: #{tpu_custom_call.1} parent=91 // pred_region
          %756 = dma.done %s749, 128
        $region140: #{tpu_custom_call.1} parent=91 // pred_fallthru
          _
        %s757 = sand.u32 %s37, 1
        %s758 = scalar_lea.sflag [#allocation3], %s757
        %s759 = sand.u32 %s427, 1
        %s760 = smul.addr %s759, 8
        %s761 = scalar_lea.vmem [#allocation20], %s760
        // Predicated region
        $region141: #{tpu_custom_call.1} parent=91 // pred_check
          %p762 = pneg %p440
        $region142: #{tpu_custom_call.1} parent=91 // pred_check_branch
          %764 = sbr.rel (%p762) target = $region144
        $region143: #{tpu_custom_call.1} parent=91 // pred_region
          %765 = dma.done %s758, 128
        $region144: #{tpu_custom_call.1} parent=91 // pred_fallthru
          _
        %s766 = sand.u32 %s37, 1
        %s767 = scalar_lea.sflag [#allocation3], %s766
        %s768 = sand.u32 %s45, 1
        %s769 = smul.addr %s768, 8
        %s770 = scalar_lea.vmem [#allocation2], %s769
        %p771 = pneg %p58
        %p772 = pneg %p55
        %p773 = pneg %p79
        %p774 = pneg %p76
        %p775 = pneg %p100
        %p776 = pneg %p97
        %p777 = pneg %p121
        %p778 = pneg %p118
        %p779 = pneg %p142
        %p780 = pneg %p139
        %p781 = pneg %p163
        %p782 = pneg %p160
        %p783 = pneg %p184
        %p784 = pneg %p181
        %p785 = pneg %p205
        %p786 = pneg %p202
        %p787 = pneg %p226
        %p788 = pneg %p223
        %p789 = pneg %p247
        %p790 = pneg %p244
        %p791 = pneg %p268
        %p792 = pneg %p265
        %p793 = pneg %p289
        %p794 = pneg %p286
        %p795 = pneg %p310
        %p796 = pneg %p307
        %p797 = scmp.lt.s32.totalorder %s37, 1
        %s798 = scalar_select %p797, %s37, 1
        %s799 = smul.addr %s798, 8
        %s800 = scalar_lea.vmem %s13, %s799
        %p801 = pneg %p336
        %p802 = pneg %p333
        %p803 = scmp.lt.s32.totalorder %s37, 1
        %s804 = scalar_select %p803, %s37, 1
        %s805 = smul.addr %s804, 8
        %s806 = scalar_lea.vmem %s14, %s805
        %p807 = pneg %p362
        %p808 = pneg %p359
        %s809 = sand.u32 %s37, 1
        %s810 = scalar_lea.sflag [#allocation3], %s809
        %s811 = sand.u32 %s375, 1
        %s812 = smul.addr %s811, 8
        %s813 = scalar_lea.vmem [#allocation18], %s812
        %p814 = pneg %p388
        %p815 = pneg %p385
        %s816 = sand.u32 %s37, 1
        %s817 = scalar_lea.sflag [#allocation3], %s816
        %s818 = sand.u32 %s401, 1
        %s819 = smul.addr %s818, 8
        %s820 = scalar_lea.vmem [#allocation19], %s819
        %p821 = pneg %p414
        %p822 = pneg %p411
        %s823 = sand.u32 %s37, 1
        %s824 = scalar_lea.sflag [#allocation3], %s823
        %s825 = sand.u32 %s427, 1
        %s826 = smul.addr %s825, 8
        %s827 = scalar_lea.vmem [#allocation20], %s826
        %p828 = pneg %p440
        %p829 = pneg %p437
        %p830 = pneg %p466
        %p831 = pneg %p463
        %p832 = scmp.lt.s32.totalorder %s37, 1
        %s833 = scalar_select %p832, %s37, 1
        %s834 = smul.addr %s833, 8
        %s835 = scalar_lea.vmem %s18, %s834
        %p836 = scmp.lt.s32.totalorder %s37, 1
        %s837 = scalar_select %p836, %s37, 1
        %s838 = smul.addr %s837, 8
        %s839 = scalar_lea.vmem %s13, %s838
        %p840 = scmp.lt.s32.totalorder %s37, 1
        %s841 = scalar_select %p840, %s37, 1
        %s842 = smul.addr %s841, 8
        %s843 = scalar_lea.vmem %s14, %s842
        %p844 = scmp.lt.s32.totalorder %s37, 1
        %s845 = scalar_select %p844, %s37, 1
        %s846 = smul.addr %s845, 8
        %s847 = scalar_lea.vmem %s18, %s846
        %v848 = vld [vmem:[%s698] sm:$0xff]
        %v849 = vld [vmem:[#allocation4] sm:$0xff]
        %v850 = vld [vmem:[#allocation4 + $0x8] sm:$0xff]
        %v851 = vld [vmem:[%s2] sm:$0x1]
        %v853 = vlaneseq
        %v854 = vshrl.u32 %v853, 7
        %v855 = vsub.s32 0, %v854
        %v856 = vrot.slane %v851, %v855
        %vm858 = vcmask 130048
        %v860 = vsel %vm858, %v848, 0
        %862 = vmatprep.subr.mxu0 0.0
        %863 = vmatpush1.msra.mxu0 0.0
        %864 = vmatprep.subr.mxu0 0.0
        %865 = vmatpush1.msra.mxu0 0.0
        %866 = vmatprep.subr.mxu0 0.0
        %867 = vmatpush1.msra.mxu0 0.0
        %868 = vmatprep.subr.mxu0 0.0
        %869 = vmatpush1.msra.mxu0 0.0
        %870 = vmatprep.subr.mxu0 0.0
        %871 = vmatpush1.msra.mxu0 0.0
        %872 = vmatprep.subr.mxu0 0.0
        %873 = vmatpush1.msra.mxu0 0.0
        %874 = vmatprep.subr.mxu0 0.0
        %875 = vmatpush1.msra.mxu0 0.0
        %876 = vmatprep.subr.mxu0 0.0
        %877 = vmatpush1.msra.mxu0 0.0
        %878 = vmatprep.subr.mxu0 0.0
        %879 = vmatpush1.msra.mxu0 0.0
        %880 = vmatprep.subr.mxu0 0.0
        %881 = vmatpush1.msra.mxu0 0.0
        %882 = vmatprep.subr.mxu0 0.0
        %883 = vmatpush1.msra.mxu0 0.0
        %884 = vmatprep.subr.mxu0 0.0
        %885 = vmatpush1.msra.mxu0 0.0
        %886 = vmatprep.subr.mxu0 0.0
        %887 = vmatpush1.msra.mxu0 0.0
        %888 = vmatprep.subr.mxu0 0.0
        %889 = vmatpush1.msra.mxu0 0.0
        %890 = vmatprep.subr.mxu0 0.0
        %891 = vmatpush1.msra.mxu0 %v850
        %892 = vmatprep.subr.mxu0 0.0
        %893 = vmatpush1.msra.mxu0 %v849
        %894 = vmatprep.subr.mxu0 0.0
        %895 = vmatpush2.msra.mxu0 0.0
        %896 = vmatprep.subr.mxu0 0.0
        %897 = vmatpush2.msra.mxu0 0.0
        %898 = vmatprep.subr.mxu0 0.0
        %899 = vmatpush2.msra.mxu0 0.0
        %900 = vmatprep.subr.mxu0 0.0
        %901 = vmatpush2.msra.mxu0 0.0
        %902 = vmatprep.subr.mxu0 0.0
        %903 = vmatpush2.msra.mxu0 0.0
        %904 = vmatprep.subr.mxu0 0.0
        %905 = vmatpush2.msra.mxu0 0.0
        %906 = vmatprep.subr.mxu0 0.0
        %907 = vmatpush2.msra.mxu0 0.0
        %908 = vmatprep.subr.mxu0 0.0
        %909 = vmatpush2.msra.mxu0 0.0
        %910 = vmatprep.subr.mxu0 0.0
        %911 = vmatpush2.msra.mxu0 0.0
        %912 = vmatprep.subr.mxu0 0.0
        %913 = vmatpush2.msra.mxu0 0.0
        %914 = vmatprep.subr.mxu0 0.0
        %915 = vmatpush2.msra.mxu0 0.0
        %916 = vmatprep.subr.mxu0 0.0
        %917 = vmatpush2.msra.mxu0 0.0
        %918 = vmatprep.subr.mxu0 0.0
        %919 = vmatpush2.msra.mxu0 0.0
        %920 = vmatprep.subr.mxu0 0.0
        %921 = vmatpush2.msra.mxu0 0.0
        %922 = vmatprep.subr.mxu0 0.0
        %923 = vmatpush2.msra.mxu0 0.0
        %924 = vmatprep.subr.mxu0 0.0
        %925 = vmatpush2.msra.mxu0 0.0
        %926 = vmatprep.mubr.f32.mxu0 0.0
        %927 = vmatmul.mubr.f32.gmra.mxu0 %v860
        %v928 = vpop.f32.mrf.mxu0
        %v929 = vadd.f32 %v856, %v928
        %v930 = vpop.f32.mrf.mxu0
        %931 = vdwg.mxu0
        %v932 = vmax.f32 %v929, 0.0
        %v933 = vld [vmem:[%s839] sm:$0xff]
        %vm934 = vcmp.lt.u32.totalorder %v933, 2147483648
        %v935 = vsel %vm934, %v932, 0.0
        %v936 = vmul.f32 %v935, 2.0
        %v937 = vld [vmem:[%s3] sm:$0xff]
        %v938 = vld [vmem:[%s3 + $0x8] sm:$0xff]
        %v939 = vld [vmem:[%s3 + $0x10] sm:$0xff]
        %v940 = vld [vmem:[%s3 + $0x18] sm:$0xff]
        %v941 = vld [vmem:[#allocation6] sm:$0x1]
        %v943 = vlaneseq
        %v944 = vshrl.u32 %v943, 7
        %v945 = vsub.s32 0, %v944
        %v946 = vrot.slane %v941, %v945
        %vm948 = vcmask 261120
        %v950 = vsel %vm948, %v936, 0
        %952 = vmatprep.subr.mxu0 0.0
        %953 = vmatpush1.msra.mxu0 0.0
        %954 = vmatprep.subr.mxu0 0.0
        %955 = vmatpush1.msra.mxu0 0.0
        %956 = vmatprep.subr.mxu0 0.0
        %957 = vmatpush1.msra.mxu0 0.0
        %958 = vmatprep.subr.mxu0 0.0
        %959 = vmatpush1.msra.mxu0 0.0
        %960 = vmatprep.subr.mxu0 0.0
        %961 = vmatpush1.msra.mxu0 0.0
        %962 = vmatprep.subr.mxu0 0.0
        %963 = vmatpush1.msra.mxu0 0.0
        %964 = vmatprep.subr.mxu0 0.0
        %965 = vmatpush1.msra.mxu0 0.0
        %966 = vmatprep.subr.mxu0 0.0
        %967 = vmatpush1.msra.mxu0 0.0
        %968 = vmatprep.subr.mxu0 0.0
        %969 = vmatpush1.msra.mxu0 0.0
        %970 = vmatprep.subr.mxu0 0.0
        %971 = vmatpush1.msra.mxu0 0.0
        %972 = vmatprep.subr.mxu0 0.0
        %973 = vmatpush1.msra.mxu0 0.0
        %974 = vmatprep.subr.mxu0 0.0
        %975 = vmatpush1.msra.mxu0 0.0
        %976 = vmatprep.subr.mxu0 0.0
        %977 = vmatpush1.msra.mxu0 %v940
        %978 = vmatprep.subr.mxu0 0.0
        %979 = vmatpush1.msra.mxu0 %v939
        %980 = vmatprep.subr.mxu0 0.0
        %981 = vmatpush1.msra.mxu0 %v938
        %982 = vmatprep.subr.mxu0 0.0
        %983 = vmatpush1.msra.mxu0 %v937
        %984 = vmatprep.subr.mxu0 0.0
        %985 = vmatpush2.msra.mxu0 0.0
        %986 = vmatprep.subr.mxu0 0.0
        %987 = vmatpush2.msra.mxu0 0.0
        %988 = vmatprep.subr.mxu0 0.0
        %989 = vmatpush2.msra.mxu0 0.0
        %990 = vmatprep.subr.mxu0 0.0
        %991 = vmatpush2.msra.mxu0 0.0
        %992 = vmatprep.subr.mxu0 0.0
        %993 = vmatpush2.msra.mxu0 0.0
        %994 = vmatprep.subr.mxu0 0.0
        %995 = vmatpush2.msra.mxu0 0.0
        %996 = vmatprep.subr.mxu0 0.0
        %997 = vmatpush2.msra.mxu0 0.0
        %998 = vmatprep.subr.mxu0 0.0
        %999 = vmatpush2.msra.mxu0 0.0
        %1000 = vmatprep.subr.mxu0 0.0
        %1001 = vmatpush2.msra.mxu0 0.0
        %1002 = vmatprep.subr.mxu0 0.0
        %1003 = vmatpush2.msra.mxu0 0.0
        %1004 = vmatprep.subr.mxu0 0.0
        %1005 = vmatpush2.msra.mxu0 0.0
        %1006 = vmatprep.subr.mxu0 0.0
        %1007 = vmatpush2.msra.mxu0 0.0
        %1008 = vmatprep.subr.mxu0 0.0
        %1009 = vmatpush2.msra.mxu0 0.0
        %1010 = vmatprep.subr.mxu0 0.0
        %1011 = vmatpush2.msra.mxu0 0.0
        %1012 = vmatprep.subr.mxu0 0.0
        %1013 = vmatpush2.msra.mxu0 0.0
        %1014 = vmatprep.subr.mxu0 0.0
        %1015 = vmatpush2.msra.mxu0 0.0
        %1016 = vmatprep.mubr.f32.mxu0 0.0
        %1017 = vmatmul.mubr.f32.gmra.mxu0 %v950
        %v1018 = vpop.f32.mrf.mxu0
        %v1019 = vadd.f32 %v946, %v1018
        %v1020 = vpop.f32.mrf.mxu0
        %1021 = vdwg.mxu0
        %v1022 = vmax.f32 %v1019, 0.0
        %v1023 = vld [vmem:[%s843] sm:$0xff]
        %vm1024 = vcmp.lt.u32.totalorder %v1023, 2147483648
        %v1025 = vsel %vm1024, %v1022, 0.0
        %v1026 = vmul.f32 %v1025, 2.0
        %v1027 = vld [vmem:[#allocation7] sm:$0xff]
        %v1028 = vld [vmem:[#allocation7 + $0x8] sm:$0xff]
        %v1029 = vld [vmem:[#allocation7 + $0x10] sm:$0xff]
        %v1030 = vld [vmem:[#allocation7 + $0x18] sm:$0xff]
        %v1031 = vld [vmem:[#allocation9] sm:$0x1]
        %v1033 = vlaneseq
        %v1034 = vshrl.u32 %v1033, 7
        %v1035 = vsub.s32 0, %v1034
        %v1036 = vrot.slane %v1031, %v1035
        %v1039 = vsel %vm948, %v1026, 0
        %1041 = vmatprep.subr.mxu0 0.0
        %1042 = vmatpush1.msra.mxu0 0.0
        %1043 = vmatprep.subr.mxu0 0.0
        %1044 = vmatpush1.msra.mxu0 0.0
        %1045 = vmatprep.subr.mxu0 0.0
        %1046 = vmatpush1.msra.mxu0 0.0
        %1047 = vmatprep.subr.mxu0 0.0
        %1048 = vmatpush1.msra.mxu0 0.0
        %1049 = vmatprep.subr.mxu0 0.0
        %1050 = vmatpush1.msra.mxu0 0.0
        %1051 = vmatprep.subr.mxu0 0.0
        %1052 = vmatpush1.msra.mxu0 0.0
        %1053 = vmatprep.subr.mxu0 0.0
        %1054 = vmatpush1.msra.mxu0 0.0
        %1055 = vmatprep.subr.mxu0 0.0
        %1056 = vmatpush1.msra.mxu0 0.0
        %1057 = vmatprep.subr.mxu0 0.0
        %1058 = vmatpush1.msra.mxu0 0.0
        %1059 = vmatprep.subr.mxu0 0.0
        %1060 = vmatpush1.msra.mxu0 0.0
        %1061 = vmatprep.subr.mxu0 0.0
        %1062 = vmatpush1.msra.mxu0 0.0
        %1063 = vmatprep.subr.mxu0 0.0
        %1064 = vmatpush1.msra.mxu0 0.0
        %1065 = vmatprep.subr.mxu0 0.0
        %1066 = vmatpush1.msra.mxu0 %v1030
        %1067 = vmatprep.subr.mxu0 0.0
        %1068 = vmatpush1.msra.mxu0 %v1029
        %1069 = vmatprep.subr.mxu0 0.0
        %1070 = vmatpush1.msra.mxu0 %v1028
        %1071 = vmatprep.subr.mxu0 0.0
        %1072 = vmatpush1.msra.mxu0 %v1027
        %1073 = vmatprep.subr.mxu0 0.0
        %1074 = vmatpush2.msra.mxu0 0.0
        %1075 = vmatprep.subr.mxu0 0.0
        %1076 = vmatpush2.msra.mxu0 0.0
        %1077 = vmatprep.subr.mxu0 0.0
        %1078 = vmatpush2.msra.mxu0 0.0
        %1079 = vmatprep.subr.mxu0 0.0
        %1080 = vmatpush2.msra.mxu0 0.0
        %1081 = vmatprep.subr.mxu0 0.0
        %1082 = vmatpush2.msra.mxu0 0.0
        %1083 = vmatprep.subr.mxu0 0.0
        %1084 = vmatpush2.msra.mxu0 0.0
        %1085 = vmatprep.subr.mxu0 0.0
        %1086 = vmatpush2.msra.mxu0 0.0
        %1087 = vmatprep.subr.mxu0 0.0
        %1088 = vmatpush2.msra.mxu0 0.0
        %1089 = vmatprep.subr.mxu0 0.0
        %1090 = vmatpush2.msra.mxu0 0.0
        %1091 = vmatprep.subr.mxu0 0.0
        %1092 = vmatpush2.msra.mxu0 0.0
        %1093 = vmatprep.subr.mxu0 0.0
        %1094 = vmatpush2.msra.mxu0 0.0
        %1095 = vmatprep.subr.mxu0 0.0
        %1096 = vmatpush2.msra.mxu0 0.0
        %1097 = vmatprep.subr.mxu0 0.0
        %1098 = vmatpush2.msra.mxu0 0.0
        %1099 = vmatprep.subr.mxu0 0.0
        %1100 = vmatpush2.msra.mxu0 0.0
        %1101 = vmatprep.subr.mxu0 0.0
        %1102 = vmatpush2.msra.mxu0 0.0
        %1103 = vmatprep.subr.mxu0 0.0
        %1104 = vmatpush2.msra.mxu0 0.0
        %1105 = vmatprep.mubr.f32.mxu0 0.0
        %1106 = vmatmul.mubr.f32.gmra.mxu0 %v1039
        %v1107 = vpop.f32.mrf.mxu0
        %v1108 = vadd.f32 %v1036, %v1107
        %v1109 = vpop.f32.mrf.mxu0
        %1110 = vdwg.mxu0
        %v1111 = vmax.f32 %v1108, 0.0
        %v1112 = vld [vmem:[%s743] sm:$0xff]
        %vm1113 = vcmp.lt.u32.totalorder %v1112, 2147483648
        %v1114 = vsel %vm1113, %v1111, 0.0
        %v1115 = vmul.f32 %v1114, 2.0
        %v1116 = vld [vmem:[#allocation10] sm:$0xff]
        %v1117 = vld [vmem:[#allocation10 + $0x8] sm:$0xff]
        %v1118 = vld [vmem:[#allocation10 + $0x10] sm:$0xff]
        %v1119 = vld [vmem:[#allocation10 + $0x18] sm:$0xff]
        %v1120 = vld [vmem:[#allocation12] sm:$0x1]
        %v1122 = vlaneseq
        %v1123 = vshrl.u32 %v1122, 7
        %v1124 = vsub.s32 0, %v1123
        %v1125 = vrot.slane %v1120, %v1124
        %v1128 = vsel %vm948, %v1115, 0
        %1130 = vmatprep.subr.mxu0 0.0
        %1131 = vmatpush1.msra.mxu0 0.0
        %1132 = vmatprep.subr.mxu0 0.0
        %1133 = vmatpush1.msra.mxu0 0.0
        %1134 = vmatprep.subr.mxu0 0.0
        %1135 = vmatpush1.msra.mxu0 0.0
        %1136 = vmatprep.subr.mxu0 0.0
        %1137 = vmatpush1.msra.mxu0 0.0
        %1138 = vmatprep.subr.mxu0 0.0
        %1139 = vmatpush1.msra.mxu0 0.0
        %1140 = vmatprep.subr.mxu0 0.0
        %1141 = vmatpush1.msra.mxu0 0.0
        %1142 = vmatprep.subr.mxu0 0.0
        %1143 = vmatpush1.msra.mxu0 0.0
        %1144 = vmatprep.subr.mxu0 0.0
        %1145 = vmatpush1.msra.mxu0 0.0
        %1146 = vmatprep.subr.mxu0 0.0
        %1147 = vmatpush1.msra.mxu0 0.0
        %1148 = vmatprep.subr.mxu0 0.0
        %1149 = vmatpush1.msra.mxu0 0.0
        %1150 = vmatprep.subr.mxu0 0.0
        %1151 = vmatpush1.msra.mxu0 0.0
        %1152 = vmatprep.subr.mxu0 0.0
        %1153 = vmatpush1.msra.mxu0 0.0
        %1154 = vmatprep.subr.mxu0 0.0
        %1155 = vmatpush1.msra.mxu0 %v1119
        %1156 = vmatprep.subr.mxu0 0.0
        %1157 = vmatpush1.msra.mxu0 %v1118
        %1158 = vmatprep.subr.mxu0 0.0
        %1159 = vmatpush1.msra.mxu0 %v1117
        %1160 = vmatprep.subr.mxu0 0.0
        %1161 = vmatpush1.msra.mxu0 %v1116
        %1162 = vmatprep.subr.mxu0 0.0
        %1163 = vmatpush2.msra.mxu0 0.0
        %1164 = vmatprep.subr.mxu0 0.0
        %1165 = vmatpush2.msra.mxu0 0.0
        %1166 = vmatprep.subr.mxu0 0.0
        %1167 = vmatpush2.msra.mxu0 0.0
        %1168 = vmatprep.subr.mxu0 0.0
        %1169 = vmatpush2.msra.mxu0 0.0
        %1170 = vmatprep.subr.mxu0 0.0
        %1171 = vmatpush2.msra.mxu0 0.0
        %1172 = vmatprep.subr.mxu0 0.0
        %1173 = vmatpush2.msra.mxu0 0.0
        %1174 = vmatprep.subr.mxu0 0.0
        %1175 = vmatpush2.msra.mxu0 0.0
        %1176 = vmatprep.subr.mxu0 0.0
        %1177 = vmatpush2.msra.mxu0 0.0
        %1178 = vmatprep.subr.mxu0 0.0
        %1179 = vmatpush2.msra.mxu0 0.0
        %1180 = vmatprep.subr.mxu0 0.0
        %1181 = vmatpush2.msra.mxu0 0.0
        %1182 = vmatprep.subr.mxu0 0.0
        %1183 = vmatpush2.msra.mxu0 0.0
        %1184 = vmatprep.subr.mxu0 0.0
        %1185 = vmatpush2.msra.mxu0 0.0
        %1186 = vmatprep.subr.mxu0 0.0
        %1187 = vmatpush2.msra.mxu0 0.0
        %1188 = vmatprep.subr.mxu0 0.0
        %1189 = vmatpush2.msra.mxu0 0.0
        %1190 = vmatprep.subr.mxu0 0.0
        %1191 = vmatpush2.msra.mxu0 0.0
        %1192 = vmatprep.subr.mxu0 0.0
        %1193 = vmatpush2.msra.mxu0 0.0
        %1194 = vmatprep.mubr.f32.mxu0 0.0
        %1195 = vmatmul.mubr.f32.gmra.mxu0 %v1128
        %v1196 = vpop.f32.mrf.mxu0
        %v1197 = vadd.f32 %v1125, %v1196
        %v1198 = vpop.f32.mrf.mxu0
        %1199 = vdwg.mxu0
        %v1200 = vmax.f32 %v1197, 0.0
        %v1201 = vld [vmem:[%s752] sm:$0xff]
        %vm1202 = vcmp.lt.u32.totalorder %v1201, 2147483648
        %v1203 = vsel %vm1202, %v1200, 0.0
        %v1204 = vmul.f32 %v1203, 2.0
        %v1205 = vld [vmem:[#allocation13] sm:$0xff]
        %v1206 = vld [vmem:[#allocation13 + $0x8] sm:$0xff]
        %v1207 = vld [vmem:[#allocation13 + $0x10] sm:$0xff]
        %v1208 = vld [vmem:[#allocation13 + $0x18] sm:$0xff]
        %v1209 = vld [vmem:[#allocation15] sm:$0x1]
        %v1211 = vlaneseq
        %v1212 = vshrl.u32 %v1211, 7
        %v1213 = vsub.s32 0, %v1212
        %v1214 = vrot.slane %v1209, %v1213
        %v1217 = vsel %vm948, %v1204, 0
        %1219 = vmatprep.subr.mxu0 0.0
        %1220 = vmatpush1.msra.mxu0 0.0
        %1221 = vmatprep.subr.mxu0 0.0
        %1222 = vmatpush1.msra.mxu0 0.0
        %1223 = vmatprep.subr.mxu0 0.0
        %1224 = vmatpush1.msra.mxu0 0.0
        %1225 = vmatprep.subr.mxu0 0.0
        %1226 = vmatpush1.msra.mxu0 0.0
        %1227 = vmatprep.subr.mxu0 0.0
        %1228 = vmatpush1.msra.mxu0 0.0
        %1229 = vmatprep.subr.mxu0 0.0
        %1230 = vmatpush1.msra.mxu0 0.0
        %1231 = vmatprep.subr.mxu0 0.0
        %1232 = vmatpush1.msra.mxu0 0.0
        %1233 = vmatprep.subr.mxu0 0.0
        %1234 = vmatpush1.msra.mxu0 0.0
        %1235 = vmatprep.subr.mxu0 0.0
        %1236 = vmatpush1.msra.mxu0 0.0
        %1237 = vmatprep.subr.mxu0 0.0
        %1238 = vmatpush1.msra.mxu0 0.0
        %1239 = vmatprep.subr.mxu0 0.0
        %1240 = vmatpush1.msra.mxu0 0.0
        %1241 = vmatprep.subr.mxu0 0.0
        %1242 = vmatpush1.msra.mxu0 0.0
        %1243 = vmatprep.subr.mxu0 0.0
        %1244 = vmatpush1.msra.mxu0 %v1208
        %1245 = vmatprep.subr.mxu0 0.0
        %1246 = vmatpush1.msra.mxu0 %v1207
        %1247 = vmatprep.subr.mxu0 0.0
        %1248 = vmatpush1.msra.mxu0 %v1206
        %1249 = vmatprep.subr.mxu0 0.0
        %1250 = vmatpush1.msra.mxu0 %v1205
        %1251 = vmatprep.subr.mxu0 0.0
        %1252 = vmatpush2.msra.mxu0 0.0
        %1253 = vmatprep.subr.mxu0 0.0
        %1254 = vmatpush2.msra.mxu0 0.0
        %1255 = vmatprep.subr.mxu0 0.0
        %1256 = vmatpush2.msra.mxu0 0.0
        %1257 = vmatprep.subr.mxu0 0.0
        %1258 = vmatpush2.msra.mxu0 0.0
        %1259 = vmatprep.subr.mxu0 0.0
        %1260 = vmatpush2.msra.mxu0 0.0
        %1261 = vmatprep.subr.mxu0 0.0
        %1262 = vmatpush2.msra.mxu0 0.0
        %1263 = vmatprep.subr.mxu0 0.0
        %1264 = vmatpush2.msra.mxu0 0.0
        %1265 = vmatprep.subr.mxu0 0.0
        %1266 = vmatpush2.msra.mxu0 0.0
        %1267 = vmatprep.subr.mxu0 0.0
        %1268 = vmatpush2.msra.mxu0 0.0
        %1269 = vmatprep.subr.mxu0 0.0
        %1270 = vmatpush2.msra.mxu0 0.0
        %1271 = vmatprep.subr.mxu0 0.0
        %1272 = vmatpush2.msra.mxu0 0.0
        %1273 = vmatprep.subr.mxu0 0.0
        %1274 = vmatpush2.msra.mxu0 0.0
        %1275 = vmatprep.subr.mxu0 0.0
        %1276 = vmatpush2.msra.mxu0 0.0
        %1277 = vmatprep.subr.mxu0 0.0
        %1278 = vmatpush2.msra.mxu0 0.0
        %1279 = vmatprep.subr.mxu0 0.0
        %1280 = vmatpush2.msra.mxu0 0.0
        %1281 = vmatprep.subr.mxu0 0.0
        %1282 = vmatpush2.msra.mxu0 0.0
        %1283 = vmatprep.mubr.f32.mxu0 0.0
        %1284 = vmatmul.mubr.f32.gmra.mxu0 %v1217
        %v1285 = vpop.f32.mrf.mxu0
        %v1286 = vadd.f32 %v1214, %v1285
        %v1287 = vpop.f32.mrf.mxu0
        %1288 = vdwg.mxu0
        %v1289 = vmax.f32 %v1286, 0.0
        %v1290 = vld [vmem:[%s761] sm:$0xff]
        %vm1291 = vcmp.lt.u32.totalorder %v1290, 2147483648
        %v1292 = vsel %vm1291, %v1289, 0.0
        %v1293 = vmul.f32 %v1292, 2.0
        %v1294 = vld [vmem:[%s11] sm:$0xff]
        %v1295 = vld [vmem:[%s11 + $0x8] sm:$0xff]
        %v1296 = vld [vmem:[%s11 + $0x10] sm:$0xff]
        %v1297 = vld [vmem:[%s11 + $0x18] sm:$0xff]
        %v1298 = vld [vmem:[#allocation16] sm:$0x1]
        %v1300 = vlaneseq
        %v1301 = vshrl.u32 %v1300, 7
        %v1302 = vsub.s32 0, %v1301
        %v1303 = vrot.slane %v1298, %v1302
        %v1306 = vsel %vm948, %v1293, 0
        %1308 = vmatprep.subr.mxu0 0.0
        %1309 = vmatpush1.msra.mxu0 0.0
        %1310 = vmatprep.subr.mxu0 0.0
        %1311 = vmatpush1.msra.mxu0 0.0
        %1312 = vmatprep.subr.mxu0 0.0
        %1313 = vmatpush1.msra.mxu0 0.0
        %1314 = vmatprep.subr.mxu0 0.0
        %1315 = vmatpush1.msra.mxu0 0.0
        %1316 = vmatprep.subr.mxu0 0.0
        %1317 = vmatpush1.msra.mxu0 0.0
        %1318 = vmatprep.subr.mxu0 0.0
        %1319 = vmatpush1.msra.mxu0 0.0
        %1320 = vmatprep.subr.mxu0 0.0
        %1321 = vmatpush1.msra.mxu0 0.0
        %1322 = vmatprep.subr.mxu0 0.0
        %1323 = vmatpush1.msra.mxu0 0.0
        %1324 = vmatprep.subr.mxu0 0.0
        %1325 = vmatpush1.msra.mxu0 0.0
        %1326 = vmatprep.subr.mxu0 0.0
        %1327 = vmatpush1.msra.mxu0 0.0
        %1328 = vmatprep.subr.mxu0 0.0
        %1329 = vmatpush1.msra.mxu0 0.0
        %1330 = vmatprep.subr.mxu0 0.0
        %1331 = vmatpush1.msra.mxu0 0.0
        %1332 = vmatprep.subr.mxu0 0.0
        %1333 = vmatpush1.msra.mxu0 %v1297
        %1334 = vmatprep.subr.mxu0 0.0
        %1335 = vmatpush1.msra.mxu0 %v1296
        %1336 = vmatprep.subr.mxu0 0.0
        %1337 = vmatpush1.msra.mxu0 %v1295
        %1338 = vmatprep.subr.mxu0 0.0
        %1339 = vmatpush1.msra.mxu0 %v1294
        %1340 = vmatprep.subr.mxu0 0.0
        %1341 = vmatpush2.msra.mxu0 0.0
        %1342 = vmatprep.subr.mxu0 0.0
        %1343 = vmatpush2.msra.mxu0 0.0
        %1344 = vmatprep.subr.mxu0 0.0
        %1345 = vmatpush2.msra.mxu0 0.0
        %1346 = vmatprep.subr.mxu0 0.0
        %1347 = vmatpush2.msra.mxu0 0.0
        %1348 = vmatprep.subr.mxu0 0.0
        %1349 = vmatpush2.msra.mxu0 0.0
        %1350 = vmatprep.subr.mxu0 0.0
        %1351 = vmatpush2.msra.mxu0 0.0
        %1352 = vmatprep.subr.mxu0 0.0
        %1353 = vmatpush2.msra.mxu0 0.0
        %1354 = vmatprep.subr.mxu0 0.0
        %1355 = vmatpush2.msra.mxu0 0.0
        %1356 = vmatprep.subr.mxu0 0.0
        %1357 = vmatpush2.msra.mxu0 0.0
        %1358 = vmatprep.subr.mxu0 0.0
        %1359 = vmatpush2.msra.mxu0 0.0
        %1360 = vmatprep.subr.mxu0 0.0
        %1361 = vmatpush2.msra.mxu0 0.0
        %1362 = vmatprep.subr.mxu0 0.0
        %1363 = vmatpush2.msra.mxu0 0.0
        %1364 = vmatprep.subr.mxu0 0.0
        %1365 = vmatpush2.msra.mxu0 0.0
        %1366 = vmatprep.subr.mxu0 0.0
        %1367 = vmatpush2.msra.mxu0 0.0
        %1368 = vmatprep.subr.mxu0 0.0
        %1369 = vmatpush2.msra.mxu0 0.0
        %1370 = vmatprep.subr.mxu0 0.0
        %1371 = vmatpush2.msra.mxu0 0.0
        %1372 = vmatprep.mubr.f32.mxu0 0.0
        %1373 = vmatmul.mubr.f32.gmra.mxu0 %v1306
        %v1374 = vpop.f32.mrf.mxu0
        %v1375 = vadd.f32 %v1303, %v1374
        %v1376 = vpop.f32.mrf.mxu0
        %1377 = vdwg.mxu0
        %vm1378 = vcmask 64512
        %1379 = vst.msk [vmem:[%s847] sm:$0xff] %vm1378, %v1375
        %p1380 = scmp.lt.s32.totalorder %s37, 1
        %s1381 = scalar_select %p1380, %s37, 1
        %s1382 = smul.addr %s1381, 8
        %s1383 = scalar_lea.vmem %s18, %s1382
        // Predicated region
        $region145: #{tpu_custom_call.1} parent=91 // pred_check
          %p1384 = pneg %p463
        $region146: #{tpu_custom_call.1} parent=91 // pred_check_branch
          %1386 = sbr.rel (%p1384) target = $region148
        $region147: #{tpu_custom_call.1} parent=91 // pred_region
          _
        $region148: #{tpu_custom_call.1} parent=91 // pred_fallthru
          _
      $region92: #{tpu_custom_call.1} parent=5 // pred_fallthru
        _
      %p1387 = scmp.le.s32.totalorder 2, %s32
      // Predicated region
      $region149: #{tpu_custom_call.1} parent=5 // pred_check
        %p1388 = pneg %p1387
      $region150: #{tpu_custom_call.1} parent=5 // pred_check_branch
        %1390 = sbr.rel (%p1388) target = $region152
      $region151: #{tpu_custom_call.1} parent=5 // pred_region
        %s1391 = ssub.s32 %s32, 2
        // Predicated region
        $region153: #{tpu_custom_call.1} parent=151 // pred_check
          %p1392 = pneg %p469
        $region154: #{tpu_custom_call.1} parent=151 // pred_check_branch
          %1394 = sbr.rel (%p1392) target = $region156
        $region155: #{tpu_custom_call.1} parent=151 // pred_region
          %p1395 = scmp.lt.s32.totalorder %s38, 1
          %s1396 = scalar_select %p1395, %s38, 1
          %s1397 = smul.addr %s1396, 8
          %s1398 = scalar_lea.vmem %s18, %s1397
        $region156: #{tpu_custom_call.1} parent=151 // pred_fallthru
          _
      $region152: #{tpu_custom_call.1} parent=5 // pred_fallthru
        _
    $region6: #{tpu_custom_call.1} parent=1 // loop_footer
      %s36 = sadd.s32 1, %s32
    $region7: #{tpu_custom_call.1} parent=1 // loop_footer_branch
      %31 = sbr.rel target = $region3
    $region8: #{tpu_custom_call.1} parent=1 // loop_exit
      _
    %1399 = vsyncpa [#allocation3], 1
    %s1400 = scalar_lea.sflag [#allocation3], 1
    %1401 = vsyncpa %s1400, 1
    %1402 = vsyncpa [#allocation5], 1
    %1403 = vsyncpa [#allocation8], 1
    %1404 = vsyncpa [#allocation11], 1
    %1405 = vsyncpa [#allocation14], 1
    %1406 = vsyncpa [#allocation17], 1

</llo_original>
